<compile_context>
chip_gen: v6e
topology: v6e:2x2x1
jax: 0.10.0
libtpu: 0.0.40
codegen_flags: <defaults>
</compile_context>

<pallas_src>
import functools

import jax
import jax.numpy as jnp
from jax.experimental import pallas as pl
from jax.experimental.pallas import tpu as pltpu


def _round_up(x, m):
    return ((x + m - 1) // m) * m


def _linear_kernel(x_ref, w_ref, b_ref, o_ref):
    """One (tm, tn) output tile, full-K reduction in a single MXU pass."""
    o_ref[...] = (
        jnp.dot(x_ref[...], w_ref[...], preferred_element_type=jnp.float32)
        + b_ref[...]
    ).astype(o_ref.dtype)


@functools.partial(jax.jit, static_argnames=("n_valid", "tm", "tn"))
def _pallas_linear_padded(x, w_t_padded, b_padded, *, n_valid, tm=8, tn=512):
    """y = x @ w_t_padded + b_padded, with weight already transposed/padded.

    x:          (M, K)   float32
    w_t_padded: (Kp, Np) float32  -- (in, out) layout, zero-padded
    b_padded:   (1, Np)  float32  -- zero-padded
    returns     (M, n_valid) float32
    """
    M, K = x.shape
    Kp, Np = w_t_padded.shape

    Mp = _round_up(max(M, tm), tm)
    x_p = jnp.pad(x, ((0, Mp - M), (0, Kp - K)))

    grid = (Mp // tm, Np // tn)

    cost = pl.CostEstimate(
        flops=2 * M * K * n_valid,
        transcendentals=0,
        bytes_accessed=(Kp * Np + Mp * Kp + Mp * Np) * 4,
    )

    out = pl.pallas_call(
        _linear_kernel,
        out_shape=jax.ShapeDtypeStruct((Mp, Np), jnp.float32),
        grid_spec=pltpu.PrefetchScalarGridSpec(
            num_scalar_prefetch=0,
            grid=grid,
            in_specs=[
                pl.BlockSpec((tm, Kp), lambda i, j: (i, 0)),   # x: full K row-block
                pl.BlockSpec((Kp, tn), lambda i, j: (0, j)),   # W^T: full K, tn-wide
                pl.BlockSpec((1, tn), lambda i, j: (0, j)),    # bias tile
            ],
            out_specs=pl.BlockSpec((tm, tn), lambda i, j: (i, j)),
        ),
        compiler_params=pltpu.CompilerParams(
            dimension_semantics=("parallel", "parallel"),
            vmem_limit_bytes=32 << 20,
        ),
        cost_estimate=cost,
    )(x_p, w_t_padded, b_padded)

    return out[:M, :n_valid]


class SingleFCModelPallas:
    """JAX/Pallas port of SingleFCModel (forward = fc only)."""

    def __init__(self, input_size, num_classes, temp_size=1012,
                 dropout_rate=0.5, key=jax.random.PRNGKey(0), tn=512):
        k1, k2, k3, k4 = jax.random.split(key, 4)
        # Deterministic init, same shapes/bounds as torch.nn.Linear defaults.
        bound1 = 1.0 / (input_size ** 0.5)
        self.fc_w = jax.random.uniform(
            k1, (temp_size, input_size), jnp.float32, -bound1, bound1)
        self.fc_b = jax.random.uniform(
            k2, (temp_size,), jnp.float32, -bound1, bound1)
        # fc2 is unused in forward; kept only for parameter-shape fidelity.
        bound2 = 1.0 / (temp_size ** 0.5)
        self.fc2_w = jax.random.uniform(
            k3, (num_classes, temp_size), jnp.float32, -bound2, bound2)
        self.fc2_b = jax.random.uniform(
            k4, (num_classes,), jnp.float32, -bound2, bound2)
        # dropout_rate is irrelevant in forward (dropout never applied).

        # Hoisted one-time prep: transpose weight to (K, N) and zero-pad both
        # K (lane multiple) and N (to a multiple of tn); pad bias likewise.
        self._tn = tn
        K, N = input_size, temp_size
        Kp = _round_up(K, 128)
        Np = _round_up(N, tn)
        self.fc_w_t_padded = jnp.pad(self.fc_w.T, ((0, Kp - K), (0, Np - N)))
        self.fc_b_padded = jnp.pad(self.fc_b, (0, Np - N)).reshape(1, Np)
        self._n_valid = N

    def __call__(self, x):
        return _pallas_linear_padded(
            x, self.fc_w_t_padded, self.fc_b_padded,
            n_valid=self._n_valid, tn=self._tn)


if __name__ == "__main__":
    input_size = 2048
    num_classes = 221
    temp_size = 1012
    batch = 2

    key = jax.random.PRNGKey(0)
    kx, kp = jax.random.split(key)
    x = jax.random.normal(kx, (batch, input_size), jnp.float32)

    model = SingleFCModelPallas(input_size, num_classes,
                                temp_size=temp_size, key=kp)

    y = model(x)
    y = jax.block_until_ready(y)

    # Correctness check vs. plain-JAX reference of nn.Linear.
    y_ref = x @ model.fc_w.T + model.fc_b
    assert y.shape == (batch, temp_size), y.shape
    assert jnp.allclose(y, y_ref, atol=1e-4, rtol=1e-4), \
        float(jnp.max(jnp.abs(y - y_ref)))

    print("KERNEL_OK")
</pallas_src>

<mosaic_0001>
module attributes {stable_mosaic.version = 11 : i64} {
  func.func @_linear_kernel(%arg0: i32, %arg1: i32, %arg2: memref<8x2048xf32, #tpu.memory_space<vmem>>, %arg3: memref<2048x512xf32, #tpu.memory_space<vmem>>, %arg4: memref<1x512xf32, #tpu.memory_space<vmem>>, %arg5: memref<8x512xf32, #tpu.memory_space<vmem>>) attributes {dimension_semantics = [#tpu.dimension_semantics<parallel>, #tpu.dimension_semantics<parallel>], iteration_bounds = array<i64: 1, 2>, scalar_prefetch = 0 : i64, scratch_operands = 0 : i64, tpu.core_type = #tpu.core_type<tc>, window_params = [{transform_indices = @transform_0, window_bounds = array<i64: 8, 2048>}, {transform_indices = @transform_1, window_bounds = array<i64: 2048, 512>}, {transform_indices = @transform_2, window_bounds = array<i64: 1, 512>}, {transform_indices = @transform_3, window_bounds = array<i64: 8, 512>}]} {
    %c0 = arith.constant 0 : index
    %c0_0 = arith.constant 0 : index
    %0 = vector.load %arg2[%c0, %c0_0] : memref<8x2048xf32, #tpu.memory_space<vmem>>, vector<8x2048xf32>
    %c0_1 = arith.constant 0 : index
    %c0_2 = arith.constant 0 : index
    %1 = vector.load %arg3[%c0_1, %c0_2] : memref<2048x512xf32, #tpu.memory_space<vmem>>, vector<2048x512xf32>
    %cst = arith.constant dense<0.000000e+00> : vector<8x512xf32>
    %2 = tpu.matmul %0, %1, %cst {dimension_numbers = #tpu.dot_dimension_numbers<[1], [0], [0], [1], [0, 0, 1, 1], [], []>} : vector<8x2048xf32>, vector<2048x512xf32>, vector<8x512xf32> -> vector<8x512xf32>
    %c0_3 = arith.constant 0 : index
    %c0_4 = arith.constant 0 : index
    %3 = vector.load %arg4[%c0_3, %c0_4] : memref<1x512xf32, #tpu.memory_space<vmem>>, vector<1x512xf32>
    %4 = vector.broadcast %3 : vector<1x512xf32> to vector<8x512xf32>
    %5 = arith.addf %2, %4 : vector<8x512xf32>
    %c0_5 = arith.constant 0 : index
    %c0_6 = arith.constant 0 : index
    %6 = vector.load %arg5[%c0_5, %c0_6] : memref<8x512xf32, #tpu.memory_space<vmem>>, vector<8x512xf32>
    tpu.vector_store %arg5[%c0_5, %c0_6], %5 {strides = array<i32>} : memref<8x512xf32, #tpu.memory_space<vmem>>, vector<8x512xf32>,
    return
  }
  func.func @transform_0(%arg0: i32, %arg1: i32) -> (i32, i32) {
    %c0_i32 = arith.constant 0 : i32
    %c0_i32_0 = arith.constant 0 : i32
    return %arg0, %c0_i32 : i32, i32
  }
  func.func @transform_1(%arg0: i32, %arg1: i32) -> (i32, i32) {
    %c0_i32 = arith.constant 0 : i32
    %c0_i32_0 = arith.constant 0 : i32
    return %c0_i32, %arg1 : i32, i32
  }
  func.func @transform_2(%arg0: i32, %arg1: i32) -> (i32, i32) {
    %c0_i32 = arith.constant 0 : i32
    %c0_i32_0 = arith.constant 0 : i32
    return %c0_i32, %arg1 : i32, i32
  }
  func.func @transform_3(%arg0: i32, %arg1: i32) -> (i32, i32) {
    %c0_i32 = arith.constant 0 : i32
    return %arg0, %arg1 : i32, i32
  }
}

</mosaic_0001>

<llo_original>
// kernel: _pallas_linear_padded.1
$region0: #{_pallas_linear_padded.1}
  #allocation0 [shape = 'u32[]', space=smem, size = 0x4, offset = 0x4, fixed_abs, tag = 'smem constant byte address 0x4 - core index']
  #allocation1 [shape = 'u32[144,128]{1,0:T(1,128)}', space=vmem, size = 0x12000, scoped, tag = 'internal scratch']
  %s0 = inlined_call_operand.vmem [shape: f32[8,2048], index: 0, kind: input, shape index: {}]
  %s1 = inlined_call_operand.hbm [shape: f32[2048,1024], index: 1, kind: input, shape index: {}]
  %s2 = inlined_call_operand.hbm [shape: f32[1,1024], index: 2, kind: input, shape index: {}]
  %s3 = inlined_call_operand.vmem [shape: f32[8,1024], index: 3, kind: output, shape index: {}]
  %s4 = sld [smem:[#allocation0]]
  $region53: #{_pallas_linear_padded.1} parent=0
    _
  %s6 = ssub.s32 1, %s4
  %s7 = scalar_select 0, %s6, %s4
  $region1: #{_pallas_linear_padded.1} parent=0
    #allocation2 [shape = 'u8[8388608]{0}', space=vmem, size = 0x800000, scoped, tag = 'input window, operand 1']
    #allocation3 [shape = 's32[2]{0}', space=sflag, size = 0x8, scoped, tag = 'scoped memory for _pallas_linear_padded.1']
    #allocation4 [shape = 'u8[4096]{0}', space=vmem, size = 0x1000, scoped, tag = 'input window, operand 2']
    #allocation5 [shape = 's32[2]{0}', space=sflag, size = 0x8, scoped, tag = 'scoped memory for _pallas_linear_padded.1']
    %8 = vsyncpa [#allocation3], 0
    %s9 = scalar_lea.sflag [#allocation3], 1
    %10 = vsyncpa %s9, 0
    %11 = vsyncpa [#allocation5], 0
    %s12 = scalar_lea.sflag [#allocation5], 1
    %13 = vsyncpa %s12, 0
    loop: start=0, step=1, limit=4
    $region2: #{_pallas_linear_padded.1} parent=1 // loop_pre_header
      _
    $region3: #{_pallas_linear_padded.1} parent=1 // loop_header
      %s15 = sphi 0, %s19
      %p16 = scmp.ge.s32.totalorder %s15, 4
      %s22 = sphi 0, %s34
      %s23 = sphi 0, %s30
      %s24 = sphi 0, %s22
      %s25 = sphi 0, %s23
      %s26 = sphi 0, %s24
      %s27 = sphi 0, %s25
      %s37 = sphi 0, %s39
      %s40 = sphi 0, %s37
      %s41 = sphi 0, %s40
      %s57 = sphi 0, %s41
      %s63 = sphi 0, %s65
      %s66 = sphi 0, %s63
      %s67 = sphi 0, %s66
      %s83 = sphi 0, %s67
      %s89 = sphi 0, %s91
      %s92 = sphi 0, %s89
      %s93 = sphi 0, %s92
      %s109 = sphi 0, %s93
      %s117 = sphi 0, %s119
      %s120 = sphi 0, %s117
      %s121 = sphi 0, %s120
      %s137 = sphi 0, %s121
    $region4: #{_pallas_linear_padded.1} parent=1 // loop_header_branch
      %18 = sbr.rel (%p16) target = $region8
    $region5: #{_pallas_linear_padded.1} parent=1 // loop_body
      %s20 = ssub.s32 %s15, 1
      %s21 = ssub.s32 %s15, 2
      %s28 = sadd.s32 1, %s23
      %p29 = scmp.ge.s32.totalorder %s28, 2
      %s30 = scalar_select %p29, 0, %s28
      %s31 = sadd.s32 1, %s22
      %s32 = scalar_select %p29, %s31, %s22
      %p33 = scmp.ge.s32.totalorder %s32, 1
      %s34 = scalar_select %p33, 0, %s32
      %s35 = ssub.s32 %s22, %s34
      %p36 = scmp.eq.s32.totalorder %s35, 0
      %s38 = sadd.s32 %s37, 1
      %s39 = scalar_select %p36, %s37, %s38
      %p42 = pneg %p36
      %p43 = scmp.eq.s32.totalorder %s15, 1
      %p44 = por %p42, %p43
      %p45 = scmp.ne.s32.totalorder %s37, %s40
      %p46 = scmp.eq.s32.totalorder %s15, 0
      %p47 = por %p45, %p46
      %p48 = scmp.ne.s32.totalorder %s37, %s40
      %p49 = scmp.eq.s32.totalorder %s20, 1
      %p50 = por %p48, %p49
      %p51 = scmp.ne.s32.totalorder %s40, %s41
      %p52 = scmp.eq.s32.totalorder %s20, 0
      %p53 = por %p51, %p52
      %p54 = scmp.ne.s32.totalorder %s40, %s41
      %p55 = scmp.eq.s32.totalorder %s21, 1
      %p56 = por %p54, %p55
      %p58 = scmp.ne.s32.totalorder %s41, %s57
      %p59 = scmp.eq.s32.totalorder %s21, 0
      %p60 = por %p58, %p59
      %s61 = ssub.s32 %s23, %s30
      %p62 = scmp.eq.s32.totalorder %s61, 0
      %s64 = sadd.s32 %s63, 1
      %s65 = scalar_select %p62, %s63, %s64
      %p68 = pneg %p62
      %p69 = scmp.eq.s32.totalorder %s15, 1
      %p70 = por %p68, %p69
      %p71 = scmp.ne.s32.totalorder %s63, %s66
      %p72 = scmp.eq.s32.totalorder %s15, 0
      %p73 = por %p71, %p72
      %p74 = scmp.ne.s32.totalorder %s63, %s66
      %p75 = scmp.eq.s32.totalorder %s20, 1
      %p76 = por %p74, %p75
      %p77 = scmp.ne.s32.totalorder %s66, %s67
      %p78 = scmp.eq.s32.totalorder %s20, 0
      %p79 = por %p77, %p78
      %p80 = scmp.ne.s32.totalorder %s66, %s67
      %p81 = scmp.eq.s32.totalorder %s21, 1
      %p82 = por %p80, %p81
      %p84 = scmp.ne.s32.totalorder %s67, %s83
      %p85 = scmp.eq.s32.totalorder %s21, 0
      %p86 = por %p84, %p85
      %s87 = ssub.s32 %s23, %s30
      %p88 = scmp.eq.s32.totalorder %s87, 0
      %s90 = sadd.s32 %s89, 1
      %s91 = scalar_select %p88, %s89, %s90
      %p94 = pneg %p88
      %p95 = scmp.eq.s32.totalorder %s15, 1
      %p96 = por %p94, %p95
      %p97 = scmp.ne.s32.totalorder %s89, %s92
      %p98 = scmp.eq.s32.totalorder %s15, 0
      %p99 = por %p97, %p98
      %p100 = scmp.ne.s32.totalorder %s89, %s92
      %p101 = scmp.eq.s32.totalorder %s20, 1
      %p102 = por %p100, %p101
      %p103 = scmp.ne.s32.totalorder %s92, %s93
      %p104 = scmp.eq.s32.totalorder %s20, 0
      %p105 = por %p103, %p104
      %p106 = scmp.ne.s32.totalorder %s92, %s93
      %p107 = scmp.eq.s32.totalorder %s21, 1
      %p108 = por %p106, %p107
      %p110 = scmp.ne.s32.totalorder %s93, %s109
      %p111 = scmp.eq.s32.totalorder %s21, 0
      %p112 = por %p110, %p111
      %s113 = ssub.s32 %s22, %s34
      %s114 = ssub.s32 %s23, %s30
      %s115 = sor.u32 %s113, %s114
      %p116 = scmp.eq.s32.totalorder %s115, 0
      %s118 = sadd.s32 %s117, 1
      %s119 = scalar_select %p116, %s117, %s118
      %p122 = pneg %p116
      %p123 = scmp.eq.s32.totalorder %s15, 1
      %p124 = por %p122, %p123
      %p125 = scmp.ne.s32.totalorder %s117, %s120
      %p126 = scmp.eq.s32.totalorder %s15, 0
      %p127 = por %p125, %p126
      %p128 = scmp.ne.s32.totalorder %s117, %s120
      %p129 = scmp.eq.s32.totalorder %s20, 1
      %p130 = por %p128, %p129
      %p131 = scmp.ne.s32.totalorder %s120, %s121
      %p132 = scmp.eq.s32.totalorder %s20, 0
      %p133 = por %p131, %p132
      %p134 = scmp.ne.s32.totalorder %s120, %s121
      %p135 = scmp.eq.s32.totalorder %s21, 1
      %p136 = por %p134, %p135
      %p138 = scmp.ne.s32.totalorder %s121, %s137
      %p139 = scmp.eq.s32.totalorder %s21, 0
      %p140 = por %p138, %p139
      %p141 = scmp.le.s32.totalorder 1, %s15
      %p142 = scmp.lt.s32.totalorder %s15, 3
      %p143 = pnand %p141, %p142
      %p144 = pneg %p143
      // Predicated region
      $region9: #{_pallas_linear_padded.1} parent=5 // pred_check
        _
      $region10: #{_pallas_linear_padded.1} parent=5 // pred_check_branch
        %146 = sbr.rel (%p143) target = $region12
      $region11: #{_pallas_linear_padded.1} parent=5 // pred_region
        %s147 = ssub.s32 %s15, 1
        // Predicated region
        $region13: #{_pallas_linear_padded.1} parent=11 // pred_check
          %p148 = pneg %p53
        $region14: #{_pallas_linear_padded.1} parent=11 // pred_check_branch
          %150 = sbr.rel (%p148) target = $region16
        $region15: #{_pallas_linear_padded.1} parent=11 // pred_region
          %p151 = scmp.lt.s32.totalorder %s24, 0
          %s152 = scalar_select %p151, %s24, 0
          %s153 = smul.addr %s152, 16
          %s154 = smul.addr %s153, 8
          %s155 = scalar_lea.vmem %s0, %s154
        $region16: #{_pallas_linear_padded.1} parent=11 // pred_fallthru
          _
      $region12: #{_pallas_linear_padded.1} parent=5 // pred_fallthru
        _
      %p156 = scmp.lt.s32.totalorder %s15, 2
      // Predicated region
      $region17: #{_pallas_linear_padded.1} parent=5 // pred_check
        %p157 = pneg %p156
      $region18: #{_pallas_linear_padded.1} parent=5 // pred_check_branch
        %159 = sbr.rel (%p157) target = $region20
      $region19: #{_pallas_linear_padded.1} parent=5 // pred_region
        // Predicated region
        $region21: #{_pallas_linear_padded.1} parent=19 // pred_check
          %p160 = pneg %p73
        $region22: #{_pallas_linear_padded.1} parent=19 // pred_check_branch
          %162 = sbr.rel (%p160) target = $region24
        $region23: #{_pallas_linear_padded.1} parent=19 // pred_region
          %s163 = sand.u32 %s63, 1
          %s164 = scalar_lea.sflag [#allocation3], %s163
          %s165 = sand.u32 %s63, 1
          %s166 = smul.addr %s165, 8192
          %s167 = scalar_lea.vmem [#allocation2], %s166
          %s168 = smul.u32 4, %s23
          %s170 = ssub.s32 131072, 131072
          %171 = vsyncadd %s164, %s170
          %s172 = smul.addr %s168, 128
          %s173 = scalar_lea.hbm %s1, %s172
          %s174 = sshll.u32 %s167, 4
          %s175 = int_to_ptr.vmem [resolvable:$true] %s174
          %180 = dma.hbm_to_vmem [thread:$0]  %s173, 131072, %s175, %s164, 1024, 512, 32
        $region24: #{_pallas_linear_padded.1} parent=19 // pred_fallthru
          _
        // Predicated region
        $region25: #{_pallas_linear_padded.1} parent=19 // pred_check
          %p181 = pneg %p99
        $region26: #{_pallas_linear_padded.1} parent=19 // pred_check_branch
          %183 = sbr.rel (%p181) target = $region28
        $region27: #{_pallas_linear_padded.1} parent=19 // pred_region
          %s184 = sand.u32 %s89, 1
          %s185 = scalar_lea.sflag [#allocation5], %s184
          %s186 = sand.u32 %s89, 1
          %s187 = smul.addr %s186, 4
          %s188 = scalar_lea.vmem [#allocation4], %s187
          %s189 = smul.u32 4, %s23
          %s191 = ssub.s32 64, 64
          %192 = vsyncadd %s185, %s191
          %s193 = smul.addr %s189, 16
          %s194 = scalar_lea.hbm %s2, %s193
          %s196 = sshll.u32 %s188, 4
          %s197 = int_to_ptr.vmem [resolvable:$true] %s196
          %199 = dma.hbm_to_vmem [thread:$0]  %s194, 64, %s197, %s185
        $region28: #{_pallas_linear_padded.1} parent=19 // pred_fallthru
          _
      $region20: #{_pallas_linear_padded.1} parent=5 // pred_fallthru
        _
      %p200 = scmp.le.s32.totalorder 1, %s15
      %p201 = scmp.lt.s32.totalorder %s15, 3
      %p202 = pnand %p200, %p201
      %p203 = pneg %p202
      // Predicated region
      $region29: #{_pallas_linear_padded.1} parent=5 // pred_check
        _
      $region30: #{_pallas_linear_padded.1} parent=5 // pred_check_branch
        %205 = sbr.rel (%p202) target = $region32
      $region31: #{_pallas_linear_padded.1} parent=5 // pred_region
        %s206 = ssub.s32 %s15, 1
        %s207 = sand.u32 %s66, 1
        %s208 = scalar_lea.sflag [#allocation3], %s207
        %s209 = sand.u32 %s66, 1
        %s210 = smul.addr %s209, 8192
        %s211 = scalar_lea.vmem [#allocation2], %s210
        // Predicated region
        $region33: #{_pallas_linear_padded.1} parent=31 // pred_check
          %p212 = pneg %p79
        $region34: #{_pallas_linear_padded.1} parent=31 // pred_check_branch
          %214 = sbr.rel (%p212) target = $region36
        $region35: #{_pallas_linear_padded.1} parent=31 // pred_region
          %215 = dma.done %s208, 131072
        $region36: #{_pallas_linear_padded.1} parent=31 // pred_fallthru
          _
        %s216 = sand.u32 %s92, 1
        %s217 = scalar_lea.sflag [#allocation5], %s216
        %s218 = sand.u32 %s92, 1
        %s219 = smul.addr %s218, 4
        %s220 = scalar_lea.vmem [#allocation4], %s219
        // Predicated region
        $region37: #{_pallas_linear_padded.1} parent=31 // pred_check
          %p221 = pneg %p105
        $region38: #{_pallas_linear_padded.1} parent=31 // pred_check_branch
          %223 = sbr.rel (%p221) target = $region40
        $region39: #{_pallas_linear_padded.1} parent=31 // pred_region
          %224 = dma.done %s217, 64
        $region40: #{_pallas_linear_padded.1} parent=31 // pred_fallthru
          _
        %p225 = scmp.lt.s32.totalorder %s24, 0
        %s226 = scalar_select %p225, %s24, 0
        %s227 = smul.addr %s226, 16
        %s228 = smul.addr %s227, 8
        %s229 = scalar_lea.vmem %s0, %s228
        %p230 = pneg %p53
        %p231 = pneg %p50
        %s232 = sand.u32 %s66, 1
        %s233 = scalar_lea.sflag [#allocation3], %s232
        %s234 = sand.u32 %s66, 1
        %s235 = smul.addr %s234, 8192
        %s236 = scalar_lea.vmem [#allocation2], %s235
        %p237 = pneg %p79
        %p238 = pneg %p76
        %s239 = sand.u32 %s92, 1
        %s240 = scalar_lea.sflag [#allocation5], %s239
        %s241 = sand.u32 %s92, 1
        %s242 = smul.addr %s241, 4
        %s243 = scalar_lea.vmem [#allocation4], %s242
        %p244 = pneg %p105
        %p245 = pneg %p102
        %p246 = pneg %p133
        %p247 = pneg %p130
        %s248 = smul.u32 4, %s25
        %p249 = scmp.lt.s32.totalorder %s24, 0
        %s250 = scalar_select %p249, %s24, 0
        %p251 = scmp.lt.s32.totalorder %s248, 7
        %s252 = scalar_select %p251, %s248, 7
        %s253 = smul.addr %s250, 8
        %s254 = sadd.s32 %s252, %s253
        %s255 = smul.addr %s254, 8
        %s256 = scalar_lea.vmem %s3, %s255
        %p257 = scmp.lt.s32.totalorder %s24, 0
        %s258 = scalar_select %p257, %s24, 0
        %s259 = smul.addr %s258, 16
        %s260 = smul.addr %s259, 8
        %s261 = scalar_lea.vmem %s0, %s260
        %s262 = smul.u32 4, %s25
        %s263 = smul.u32 4, %s25
        %s264 = smul.u32 4, %s25
        %p265 = scmp.lt.s32.totalorder %s24, 0
        %s266 = scalar_select %p265, %s24, 0
        %p267 = scmp.lt.s32.totalorder %s264, 7
        %s268 = scalar_select %p267, %s264, 7
        %s269 = smul.addr %s266, 8
        %s270 = sadd.s32 %s268, %s269
        %s271 = smul.addr %s270, 8
        %s272 = scalar_lea.vmem %s3, %s271
        %s273 = smul.u32 4, %s25
        %v274 = vld [vmem:[%s261] sm:$0xff]
        %v275 = vld [vmem:[%s261 + $0x8] sm:$0xff]
        %v276 = vld [vmem:[%s261 + $0x10] sm:$0xff]
        %v277 = vld [vmem:[%s261 + $0x18] sm:$0xff]
        %v278 = vld [vmem:[%s261 + $0x20] sm:$0xff]
        %v279 = vld [vmem:[%s261 + $0x28] sm:$0xff]
        %v280 = vld [vmem:[%s261 + $0x30] sm:$0xff]
        %v281 = vld [vmem:[%s261 + $0x38] sm:$0xff]
        %v282 = vld [vmem:[%s261 + $0x40] sm:$0xff]
        %v283 = vld [vmem:[%s261 + $0x48] sm:$0xff]
        %v284 = vld [vmem:[%s261 + $0x50] sm:$0xff]
        %v285 = vld [vmem:[%s261 + $0x58] sm:$0xff]
        %v286 = vld [vmem:[%s261 + $0x60] sm:$0xff]
        %v287 = vld [vmem:[%s261 + $0x68] sm:$0xff]
        %v288 = vld [vmem:[%s261 + $0x70] sm:$0xff]
        %v289 = vld [vmem:[%s261 + $0x78] sm:$0xff]
        %v290 = vld [vmem:[%s211] sm:$0xff]
        %v291 = vld [vmem:[%s211 + $0x8] sm:$0xff]
        %v292 = vld [vmem:[%s211 + $0x10] sm:$0xff]
        %v293 = vld [vmem:[%s211 + $0x18] sm:$0xff]
        %v294 = vld [vmem:[%s211 + $0x20] sm:$0xff]
        %v295 = vld [vmem:[%s211 + $0x28] sm:$0xff]
        %v296 = vld [vmem:[%s211 + $0x30] sm:$0xff]
        %v297 = vld [vmem:[%s211 + $0x38] sm:$0xff]
        %v298 = vld [vmem:[%s211 + $0x40] sm:$0xff]
        %v299 = vld [vmem:[%s211 + $0x48] sm:$0xff]
        %v300 = vld [vmem:[%s211 + $0x50] sm:$0xff]
        %v301 = vld [vmem:[%s211 + $0x58] sm:$0xff]
        %v302 = vld [vmem:[%s211 + $0x60] sm:$0xff]
        %v303 = vld [vmem:[%s211 + $0x68] sm:$0xff]
        %v304 = vld [vmem:[%s211 + $0x70] sm:$0xff]
        %v305 = vld [vmem:[%s211 + $0x78] sm:$0xff]
        %v306 = vld [vmem:[%s211 + $0x80] sm:$0xff]
        %v307 = vld [vmem:[%s211 + $0x88] sm:$0xff]
        %v308 = vld [vmem:[%s211 + $0x90] sm:$0xff]
        %v309 = vld [vmem:[%s211 + $0x98] sm:$0xff]
        %v310 = vld [vmem:[%s211 + $0xa0] sm:$0xff]
        %v311 = vld [vmem:[%s211 + $0xa8] sm:$0xff]
        %v312 = vld [vmem:[%s211 + $0xb0] sm:$0xff]
        %v313 = vld [vmem:[%s211 + $0xb8] sm:$0xff]
        %v314 = vld [vmem:[%s211 + $0xc0] sm:$0xff]
        %v315 = vld [vmem:[%s211 + $0xc8] sm:$0xff]
        %v316 = vld [vmem:[%s211 + $0xd0] sm:$0xff]
        %v317 = vld [vmem:[%s211 + $0xd8] sm:$0xff]
        %v318 = vld [vmem:[%s211 + $0xe0] sm:$0xff]
        %v319 = vld [vmem:[%s211 + $0xe8] sm:$0xff]
        %v320 = vld [vmem:[%s211 + $0xf0] sm:$0xff]
        %v321 = vld [vmem:[%s211 + $0xf8] sm:$0xff]
        %v322 = vld [vmem:[%s211 + $0x100] sm:$0xff]
        %v323 = vld [vmem:[%s211 + $0x108] sm:$0xff]
        %v324 = vld [vmem:[%s211 + $0x110] sm:$0xff]
        %v325 = vld [vmem:[%s211 + $0x118] sm:$0xff]
        %v326 = vld [vmem:[%s211 + $0x120] sm:$0xff]
        %v327 = vld [vmem:[%s211 + $0x128] sm:$0xff]
        %v328 = vld [vmem:[%s211 + $0x130] sm:$0xff]
        %v329 = vld [vmem:[%s211 + $0x138] sm:$0xff]
        %v330 = vld [vmem:[%s211 + $0x140] sm:$0xff]
        %v331 = vld [vmem:[%s211 + $0x148] sm:$0xff]
        %v332 = vld [vmem:[%s211 + $0x150] sm:$0xff]
        %v333 = vld [vmem:[%s211 + $0x158] sm:$0xff]
        %v334 = vld [vmem:[%s211 + $0x160] sm:$0xff]
        %v335 = vld [vmem:[%s211 + $0x168] sm:$0xff]
        %v336 = vld [vmem:[%s211 + $0x170] sm:$0xff]
        %v337 = vld [vmem:[%s211 + $0x178] sm:$0xff]
        %v338 = vld [vmem:[%s211 + $0x180] sm:$0xff]
        %v339 = vld [vmem:[%s211 + $0x188] sm:$0xff]
        %v340 = vld [vmem:[%s211 + $0x190] sm:$0xff]
        %v341 = vld [vmem:[%s211 + $0x198] sm:$0xff]
        %v342 = vld [vmem:[%s211 + $0x1a0] sm:$0xff]
        %v343 = vld [vmem:[%s211 + $0x1a8] sm:$0xff]
        %v344 = vld [vmem:[%s211 + $0x1b0] sm:$0xff]
        %v345 = vld [vmem:[%s211 + $0x1b8] sm:$0xff]
        %v346 = vld [vmem:[%s211 + $0x1c0] sm:$0xff]
        %v347 = vld [vmem:[%s211 + $0x1c8] sm:$0xff]
        %v348 = vld [vmem:[%s211 + $0x1d0] sm:$0xff]
        %v349 = vld [vmem:[%s211 + $0x1d8] sm:$0xff]
        %v350 = vld [vmem:[%s211 + $0x1e0] sm:$0xff]
        %v351 = vld [vmem:[%s211 + $0x1e8] sm:$0xff]
        %v352 = vld [vmem:[%s211 + $0x1f0] sm:$0xff]
        %v353 = vld [vmem:[%s211 + $0x1f8] sm:$0xff]
        %v354 = vld [vmem:[%s211 + $0x200] sm:$0xff]
        %v355 = vld [vmem:[%s211 + $0x208] sm:$0xff]
        %v356 = vld [vmem:[%s211 + $0x210] sm:$0xff]
        %v357 = vld [vmem:[%s211 + $0x218] sm:$0xff]
        %v358 = vld [vmem:[%s211 + $0x220] sm:$0xff]
        %v359 = vld [vmem:[%s211 + $0x228] sm:$0xff]
        %v360 = vld [vmem:[%s211 + $0x230] sm:$0xff]
        %v361 = vld [vmem:[%s211 + $0x238] sm:$0xff]
        %v362 = vld [vmem:[%s211 + $0x240] sm:$0xff]
        %v363 = vld [vmem:[%s211 + $0x248] sm:$0xff]
        %v364 = vld [vmem:[%s211 + $0x250] sm:$0xff]
        %v365 = vld [vmem:[%s211 + $0x258] sm:$0xff]
        %v366 = vld [vmem:[%s211 + $0x260] sm:$0xff]
        %v367 = vld [vmem:[%s211 + $0x268] sm:$0xff]
        %v368 = vld [vmem:[%s211 + $0x270] sm:$0xff]
        %v369 = vld [vmem:[%s211 + $0x278] sm:$0xff]
        %v370 = vld [vmem:[%s211 + $0x280] sm:$0xff]
        %v371 = vld [vmem:[%s211 + $0x288] sm:$0xff]
        %v372 = vld [vmem:[%s211 + $0x290] sm:$0xff]
        %v373 = vld [vmem:[%s211 + $0x298] sm:$0xff]
        %v374 = vld [vmem:[%s211 + $0x2a0] sm:$0xff]
        %v375 = vld [vmem:[%s211 + $0x2a8] sm:$0xff]
        %v376 = vld [vmem:[%s211 + $0x2b0] sm:$0xff]
        %v377 = vld [vmem:[%s211 + $0x2b8] sm:$0xff]
        %v378 = vld [vmem:[%s211 + $0x2c0] sm:$0xff]
        %v379 = vld [vmem:[%s211 + $0x2c8] sm:$0xff]
        %v380 = vld [vmem:[%s211 + $0x2d0] sm:$0xff]
        %v381 = vld [vmem:[%s211 + $0x2d8] sm:$0xff]
        %v382 = vld [vmem:[%s211 + $0x2e0] sm:$0xff]
        %v383 = vld [vmem:[%s211 + $0x2e8] sm:$0xff]
        %v384 = vld [vmem:[%s211 + $0x2f0] sm:$0xff]
        %v385 = vld [vmem:[%s211 + $0x2f8] sm:$0xff]
        %v386 = vld [vmem:[%s211 + $0x300] sm:$0xff]
        %v387 = vld [vmem:[%s211 + $0x308] sm:$0xff]
        %v388 = vld [vmem:[%s211 + $0x310] sm:$0xff]
        %v389 = vld [vmem:[%s211 + $0x318] sm:$0xff]
        %v390 = vld [vmem:[%s211 + $0x320] sm:$0xff]
        %v391 = vld [vmem:[%s211 + $0x328] sm:$0xff]
        %v392 = vld [vmem:[%s211 + $0x330] sm:$0xff]
        %v393 = vld [vmem:[%s211 + $0x338] sm:$0xff]
        %v394 = vld [vmem:[%s211 + $0x340] sm:$0xff]
        %v395 = vld [vmem:[%s211 + $0x348] sm:$0xff]
        %v396 = vld [vmem:[%s211 + $0x350] sm:$0xff]
        %v397 = vld [vmem:[%s211 + $0x358] sm:$0xff]
        %v398 = vld [vmem:[%s211 + $0x360] sm:$0xff]
        %v399 = vld [vmem:[%s211 + $0x368] sm:$0xff]
        %v400 = vld [vmem:[%s211 + $0x370] sm:$0xff]
        %v401 = vld [vmem:[%s211 + $0x378] sm:$0xff]
        %v402 = vld [vmem:[%s211 + $0x380] sm:$0xff]
        %v403 = vld [vmem:[%s211 + $0x388] sm:$0xff]
        %v404 = vld [vmem:[%s211 + $0x390] sm:$0xff]
        %v405 = vld [vmem:[%s211 + $0x398] sm:$0xff]
        %v406 = vld [vmem:[%s211 + $0x3a0] sm:$0xff]
        %v407 = vld [vmem:[%s211 + $0x3a8] sm:$0xff]
        %v408 = vld [vmem:[%s211 + $0x3b0] sm:$0xff]
        %v409 = vld [vmem:[%s211 + $0x3b8] sm:$0xff]
        %v410 = vld [vmem:[%s211 + $0x3c0] sm:$0xff]
        %v411 = vld [vmem:[%s211 + $0x3c8] sm:$0xff]
        %v412 = vld [vmem:[%s211 + $0x3d0] sm:$0xff]
        %v413 = vld [vmem:[%s211 + $0x3d8] sm:$0xff]
        %v414 = vld [vmem:[%s211 + $0x3e0] sm:$0xff]
        %v415 = vld [vmem:[%s211 + $0x3e8] sm:$0xff]
        %v416 = vld [vmem:[%s211 + $0x3f0] sm:$0xff]
        %v417 = vld [vmem:[%s211 + $0x3f8] sm:$0xff]
        %v418 = vld [vmem:[%s211 + $0x400] sm:$0xff]
        %v419 = vld [vmem:[%s211 + $0x408] sm:$0xff]
        %v420 = vld [vmem:[%s211 + $0x410] sm:$0xff]
        %v421 = vld [vmem:[%s211 + $0x418] sm:$0xff]
        %v422 = vld [vmem:[%s211 + $0x420] sm:$0xff]
        %v423 = vld [vmem:[%s211 + $0x428] sm:$0xff]
        %v424 = vld [vmem:[%s211 + $0x430] sm:$0xff]
        %v425 = vld [vmem:[%s211 + $0x438] sm:$0xff]
        %v426 = vld [vmem:[%s211 + $0x440] sm:$0xff]
        %v427 = vld [vmem:[%s211 + $0x448] sm:$0xff]
        %v428 = vld [vmem:[%s211 + $0x450] sm:$0xff]
        %v429 = vld [vmem:[%s211 + $0x458] sm:$0xff]
        %v430 = vld [vmem:[%s211 + $0x460] sm:$0xff]
        %v431 = vld [vmem:[%s211 + $0x468] sm:$0xff]
        %v432 = vld [vmem:[%s211 + $0x470] sm:$0xff]
        %v433 = vld [vmem:[%s211 + $0x478] sm:$0xff]
        %v434 = vld [vmem:[%s211 + $0x480] sm:$0xff]
        %v435 = vld [vmem:[%s211 + $0x488] sm:$0xff]
        %v436 = vld [vmem:[%s211 + $0x490] sm:$0xff]
        %v437 = vld [vmem:[%s211 + $0x498] sm:$0xff]
        %v438 = vld [vmem:[%s211 + $0x4a0] sm:$0xff]
        %v439 = vld [vmem:[%s211 + $0x4a8] sm:$0xff]
        %v440 = vld [vmem:[%s211 + $0x4b0] sm:$0xff]
        %v441 = vld [vmem:[%s211 + $0x4b8] sm:$0xff]
        %v442 = vld [vmem:[%s211 + $0x4c0] sm:$0xff]
        %v443 = vld [vmem:[%s211 + $0x4c8] sm:$0xff]
        %v444 = vld [vmem:[%s211 + $0x4d0] sm:$0xff]
        %v445 = vld [vmem:[%s211 + $0x4d8] sm:$0xff]
        %v446 = vld [vmem:[%s211 + $0x4e0] sm:$0xff]
        %v447 = vld [vmem:[%s211 + $0x4e8] sm:$0xff]
        %v448 = vld [vmem:[%s211 + $0x4f0] sm:$0xff]
        %v449 = vld [vmem:[%s211 + $0x4f8] sm:$0xff]
        %v450 = vld [vmem:[%s211 + $0x500] sm:$0xff]
        %v451 = vld [vmem:[%s211 + $0x508] sm:$0xff]
        %v452 = vld [vmem:[%s211 + $0x510] sm:$0xff]
        %v453 = vld [vmem:[%s211 + $0x518] sm:$0xff]
        %v454 = vld [vmem:[%s211 + $0x520] sm:$0xff]
        %v455 = vld [vmem:[%s211 + $0x528] sm:$0xff]
        %v456 = vld [vmem:[%s211 + $0x530] sm:$0xff]
        %v457 = vld [vmem:[%s211 + $0x538] sm:$0xff]
        %v458 = vld [vmem:[%s211 + $0x540] sm:$0xff]
        %v459 = vld [vmem:[%s211 + $0x548] sm:$0xff]
        %v460 = vld [vmem:[%s211 + $0x550] sm:$0xff]
        %v461 = vld [vmem:[%s211 + $0x558] sm:$0xff]
        %v462 = vld [vmem:[%s211 + $0x560] sm:$0xff]
        %v463 = vld [vmem:[%s211 + $0x568] sm:$0xff]
        %v464 = vld [vmem:[%s211 + $0x570] sm:$0xff]
        %v465 = vld [vmem:[%s211 + $0x578] sm:$0xff]
        %v466 = vld [vmem:[%s211 + $0x580] sm:$0xff]
        %v467 = vld [vmem:[%s211 + $0x588] sm:$0xff]
        %v468 = vld [vmem:[%s211 + $0x590] sm:$0xff]
        %v469 = vld [vmem:[%s211 + $0x598] sm:$0xff]
        %v470 = vld [vmem:[%s211 + $0x5a0] sm:$0xff]
        %v471 = vld [vmem:[%s211 + $0x5a8] sm:$0xff]
        %v472 = vld [vmem:[%s211 + $0x5b0] sm:$0xff]
        %v473 = vld [vmem:[%s211 + $0x5b8] sm:$0xff]
        %v474 = vld [vmem:[%s211 + $0x5c0] sm:$0xff]
        %v475 = vld [vmem:[%s211 + $0x5c8] sm:$0xff]
        %v476 = vld [vmem:[%s211 + $0x5d0] sm:$0xff]
        %v477 = vld [vmem:[%s211 + $0x5d8] sm:$0xff]
        %v478 = vld [vmem:[%s211 + $0x5e0] sm:$0xff]
        %v479 = vld [vmem:[%s211 + $0x5e8] sm:$0xff]
        %v480 = vld [vmem:[%s211 + $0x5f0] sm:$0xff]
        %v481 = vld [vmem:[%s211 + $0x5f8] sm:$0xff]
        %v482 = vld [vmem:[%s211 + $0x600] sm:$0xff]
        %v483 = vld [vmem:[%s211 + $0x608] sm:$0xff]
        %v484 = vld [vmem:[%s211 + $0x610] sm:$0xff]
        %v485 = vld [vmem:[%s211 + $0x618] sm:$0xff]
        %v486 = vld [vmem:[%s211 + $0x620] sm:$0xff]
        %v487 = vld [vmem:[%s211 + $0x628] sm:$0xff]
        %v488 = vld [vmem:[%s211 + $0x630] sm:$0xff]
        %v489 = vld [vmem:[%s211 + $0x638] sm:$0xff]
        %v490 = vld [vmem:[%s211 + $0x640] sm:$0xff]
        %v491 = vld [vmem:[%s211 + $0x648] sm:$0xff]
        %v492 = vld [vmem:[%s211 + $0x650] sm:$0xff]
        %v493 = vld [vmem:[%s211 + $0x658] sm:$0xff]
        %v494 = vld [vmem:[%s211 + $0x660] sm:$0xff]
        %v495 = vld [vmem:[%s211 + $0x668] sm:$0xff]
        %v496 = vld [vmem:[%s211 + $0x670] sm:$0xff]
        %v497 = vld [vmem:[%s211 + $0x678] sm:$0xff]
        %v498 = vld [vmem:[%s211 + $0x680] sm:$0xff]
        %v499 = vld [vmem:[%s211 + $0x688] sm:$0xff]
        %v500 = vld [vmem:[%s211 + $0x690] sm:$0xff]
        %v501 = vld [vmem:[%s211 + $0x698] sm:$0xff]
        %v502 = vld [vmem:[%s211 + $0x6a0] sm:$0xff]
        %v503 = vld [vmem:[%s211 + $0x6a8] sm:$0xff]
        %v504 = vld [vmem:[%s211 + $0x6b0] sm:$0xff]
        %v505 = vld [vmem:[%s211 + $0x6b8] sm:$0xff]
        %v506 = vld [vmem:[%s211 + $0x6c0] sm:$0xff]
        %v507 = vld [vmem:[%s211 + $0x6c8] sm:$0xff]
        %v508 = vld [vmem:[%s211 + $0x6d0] sm:$0xff]
        %v509 = vld [vmem:[%s211 + $0x6d8] sm:$0xff]
        %v510 = vld [vmem:[%s211 + $0x6e0] sm:$0xff]
        %v511 = vld [vmem:[%s211 + $0x6e8] sm:$0xff]
        %v512 = vld [vmem:[%s211 + $0x6f0] sm:$0xff]
        %v513 = vld [vmem:[%s211 + $0x6f8] sm:$0xff]
        %v514 = vld [vmem:[%s211 + $0x700] sm:$0xff]
        %v515 = vld [vmem:[%s211 + $0x708] sm:$0xff]
        %v516 = vld [vmem:[%s211 + $0x710] sm:$0xff]
        %v517 = vld [vmem:[%s211 + $0x718] sm:$0xff]
        %v518 = vld [vmem:[%s211 + $0x720] sm:$0xff]
        %v519 = vld [vmem:[%s211 + $0x728] sm:$0xff]
        %v520 = vld [vmem:[%s211 + $0x730] sm:$0xff]
        %v521 = vld [vmem:[%s211 + $0x738] sm:$0xff]
        %v522 = vld [vmem:[%s211 + $0x740] sm:$0xff]
        %v523 = vld [vmem:[%s211 + $0x748] sm:$0xff]
        %v524 = vld [vmem:[%s211 + $0x750] sm:$0xff]
        %v525 = vld [vmem:[%s211 + $0x758] sm:$0xff]
        %v526 = vld [vmem:[%s211 + $0x760] sm:$0xff]
        %v527 = vld [vmem:[%s211 + $0x768] sm:$0xff]
        %v528 = vld [vmem:[%s211 + $0x770] sm:$0xff]
        %v529 = vld [vmem:[%s211 + $0x778] sm:$0xff]
        %v530 = vld [vmem:[%s211 + $0x780] sm:$0xff]
        %v531 = vld [vmem:[%s211 + $0x788] sm:$0xff]
        %v532 = vld [vmem:[%s211 + $0x790] sm:$0xff]
        %v533 = vld [vmem:[%s211 + $0x798] sm:$0xff]
        %v534 = vld [vmem:[%s211 + $0x7a0] sm:$0xff]
        %v535 = vld [vmem:[%s211 + $0x7a8] sm:$0xff]
        %v536 = vld [vmem:[%s211 + $0x7b0] sm:$0xff]
        %v537 = vld [vmem:[%s211 + $0x7b8] sm:$0xff]
        %v538 = vld [vmem:[%s211 + $0x7c0] sm:$0xff]
        %v539 = vld [vmem:[%s211 + $0x7c8] sm:$0xff]
        %v540 = vld [vmem:[%s211 + $0x7d0] sm:$0xff]
        %v541 = vld [vmem:[%s211 + $0x7d8] sm:$0xff]
        %v542 = vld [vmem:[%s211 + $0x7e0] sm:$0xff]
        %v543 = vld [vmem:[%s211 + $0x7e8] sm:$0xff]
        %v544 = vld [vmem:[%s211 + $0x7f0] sm:$0xff]
        %v545 = vld [vmem:[%s211 + $0x7f8] sm:$0xff]
        %v546 = vld [vmem:[%s211 + $0x800] sm:$0xff]
        %v547 = vld [vmem:[%s211 + $0x808] sm:$0xff]
        %v548 = vld [vmem:[%s211 + $0x810] sm:$0xff]
        %v549 = vld [vmem:[%s211 + $0x818] sm:$0xff]
        %v550 = vld [vmem:[%s211 + $0x820] sm:$0xff]
        %v551 = vld [vmem:[%s211 + $0x828] sm:$0xff]
        %v552 = vld [vmem:[%s211 + $0x830] sm:$0xff]
        %v553 = vld [vmem:[%s211 + $0x838] sm:$0xff]
        %v554 = vld [vmem:[%s211 + $0x840] sm:$0xff]
        %v555 = vld [vmem:[%s211 + $0x848] sm:$0xff]
        %v556 = vld [vmem:[%s211 + $0x850] sm:$0xff]
        %v557 = vld [vmem:[%s211 + $0x858] sm:$0xff]
        %v558 = vld [vmem:[%s211 + $0x860] sm:$0xff]
        %v559 = vld [vmem:[%s211 + $0x868] sm:$0xff]
        %v560 = vld [vmem:[%s211 + $0x870] sm:$0xff]
        %v561 = vld [vmem:[%s211 + $0x878] sm:$0xff]
        %v562 = vld [vmem:[%s211 + $0x880] sm:$0xff]
        %v563 = vld [vmem:[%s211 + $0x888] sm:$0xff]
        %v564 = vld [vmem:[%s211 + $0x890] sm:$0xff]
        %v565 = vld [vmem:[%s211 + $0x898] sm:$0xff]
        %v566 = vld [vmem:[%s211 + $0x8a0] sm:$0xff]
        %v567 = vld [vmem:[%s211 + $0x8a8] sm:$0xff]
        %v568 = vld [vmem:[%s211 + $0x8b0] sm:$0xff]
        %v569 = vld [vmem:[%s211 + $0x8b8] sm:$0xff]
        %v570 = vld [vmem:[%s211 + $0x8c0] sm:$0xff]
        %v571 = vld [vmem:[%s211 + $0x8c8] sm:$0xff]
        %v572 = vld [vmem:[%s211 + $0x8d0] sm:$0xff]
        %v573 = vld [vmem:[%s211 + $0x8d8] sm:$0xff]
        %v574 = vld [vmem:[%s211 + $0x8e0] sm:$0xff]
        %v575 = vld [vmem:[%s211 + $0x8e8] sm:$0xff]
        %v576 = vld [vmem:[%s211 + $0x8f0] sm:$0xff]
        %v577 = vld [vmem:[%s211 + $0x8f8] sm:$0xff]
        %v578 = vld [vmem:[%s211 + $0x900] sm:$0xff]
        %v579 = vld [vmem:[%s211 + $0x908] sm:$0xff]
        %v580 = vld [vmem:[%s211 + $0x910] sm:$0xff]
        %v581 = vld [vmem:[%s211 + $0x918] sm:$0xff]
        %v582 = vld [vmem:[%s211 + $0x920] sm:$0xff]
        %v583 = vld [vmem:[%s211 + $0x928] sm:$0xff]
        %v584 = vld [vmem:[%s211 + $0x930] sm:$0xff]
        %v585 = vld [vmem:[%s211 + $0x938] sm:$0xff]
        %v586 = vld [vmem:[%s211 + $0x940] sm:$0xff]
        %v587 = vld [vmem:[%s211 + $0x948] sm:$0xff]
        %v588 = vld [vmem:[%s211 + $0x950] sm:$0xff]
        %v589 = vld [vmem:[%s211 + $0x958] sm:$0xff]
        %v590 = vld [vmem:[%s211 + $0x960] sm:$0xff]
        %v591 = vld [vmem:[%s211 + $0x968] sm:$0xff]
        %v592 = vld [vmem:[%s211 + $0x970] sm:$0xff]
        %v593 = vld [vmem:[%s211 + $0x978] sm:$0xff]
        %v594 = vld [vmem:[%s211 + $0x980] sm:$0xff]
        %v595 = vld [vmem:[%s211 + $0x988] sm:$0xff]
        %v596 = vld [vmem:[%s211 + $0x990] sm:$0xff]
        %v597 = vld [vmem:[%s211 + $0x998] sm:$0xff]
        %v598 = vld [vmem:[%s211 + $0x9a0] sm:$0xff]
        %v599 = vld [vmem:[%s211 + $0x9a8] sm:$0xff]
        %v600 = vld [vmem:[%s211 + $0x9b0] sm:$0xff]
        %v601 = vld [vmem:[%s211 + $0x9b8] sm:$0xff]
        %v602 = vld [vmem:[%s211 + $0x9c0] sm:$0xff]
        %v603 = vld [vmem:[%s211 + $0x9c8] sm:$0xff]
        %v604 = vld [vmem:[%s211 + $0x9d0] sm:$0xff]
        %v605 = vld [vmem:[%s211 + $0x9d8] sm:$0xff]
        %v606 = vld [vmem:[%s211 + $0x9e0] sm:$0xff]
        %v607 = vld [vmem:[%s211 + $0x9e8] sm:$0xff]
        %v608 = vld [vmem:[%s211 + $0x9f0] sm:$0xff]
        %v609 = vld [vmem:[%s211 + $0x9f8] sm:$0xff]
        %v610 = vld [vmem:[%s211 + $0xa00] sm:$0xff]
        %v611 = vld [vmem:[%s211 + $0xa08] sm:$0xff]
        %v612 = vld [vmem:[%s211 + $0xa10] sm:$0xff]
        %v613 = vld [vmem:[%s211 + $0xa18] sm:$0xff]
        %v614 = vld [vmem:[%s211 + $0xa20] sm:$0xff]
        %v615 = vld [vmem:[%s211 + $0xa28] sm:$0xff]
        %v616 = vld [vmem:[%s211 + $0xa30] sm:$0xff]
        %v617 = vld [vmem:[%s211 + $0xa38] sm:$0xff]
        %v618 = vld [vmem:[%s211 + $0xa40] sm:$0xff]
        %v619 = vld [vmem:[%s211 + $0xa48] sm:$0xff]
        %v620 = vld [vmem:[%s211 + $0xa50] sm:$0xff]
        %v621 = vld [vmem:[%s211 + $0xa58] sm:$0xff]
        %v622 = vld [vmem:[%s211 + $0xa60] sm:$0xff]
        %v623 = vld [vmem:[%s211 + $0xa68] sm:$0xff]
        %v624 = vld [vmem:[%s211 + $0xa70] sm:$0xff]
        %v625 = vld [vmem:[%s211 + $0xa78] sm:$0xff]
        %v626 = vld [vmem:[%s211 + $0xa80] sm:$0xff]
        %v627 = vld [vmem:[%s211 + $0xa88] sm:$0xff]
        %v628 = vld [vmem:[%s211 + $0xa90] sm:$0xff]
        %v629 = vld [vmem:[%s211 + $0xa98] sm:$0xff]
        %v630 = vld [vmem:[%s211 + $0xaa0] sm:$0xff]
        %v631 = vld [vmem:[%s211 + $0xaa8] sm:$0xff]
        %v632 = vld [vmem:[%s211 + $0xab0] sm:$0xff]
        %v633 = vld [vmem:[%s211 + $0xab8] sm:$0xff]
        %v634 = vld [vmem:[%s211 + $0xac0] sm:$0xff]
        %v635 = vld [vmem:[%s211 + $0xac8] sm:$0xff]
        %v636 = vld [vmem:[%s211 + $0xad0] sm:$0xff]
        %v637 = vld [vmem:[%s211 + $0xad8] sm:$0xff]
        %v638 = vld [vmem:[%s211 + $0xae0] sm:$0xff]
        %v639 = vld [vmem:[%s211 + $0xae8] sm:$0xff]
        %v640 = vld [vmem:[%s211 + $0xaf0] sm:$0xff]
        %v641 = vld [vmem:[%s211 + $0xaf8] sm:$0xff]
        %v642 = vld [vmem:[%s211 + $0xb00] sm:$0xff]
        %v643 = vld [vmem:[%s211 + $0xb08] sm:$0xff]
        %v644 = vld [vmem:[%s211 + $0xb10] sm:$0xff]
        %v645 = vld [vmem:[%s211 + $0xb18] sm:$0xff]
        %v646 = vld [vmem:[%s211 + $0xb20] sm:$0xff]
        %v647 = vld [vmem:[%s211 + $0xb28] sm:$0xff]
        %v648 = vld [vmem:[%s211 + $0xb30] sm:$0xff]
        %v649 = vld [vmem:[%s211 + $0xb38] sm:$0xff]
        %v650 = vld [vmem:[%s211 + $0xb40] sm:$0xff]
        %v651 = vld [vmem:[%s211 + $0xb48] sm:$0xff]
        %v652 = vld [vmem:[%s211 + $0xb50] sm:$0xff]
        %v653 = vld [vmem:[%s211 + $0xb58] sm:$0xff]
        %v654 = vld [vmem:[%s211 + $0xb60] sm:$0xff]
        %v655 = vld [vmem:[%s211 + $0xb68] sm:$0xff]
        %v656 = vld [vmem:[%s211 + $0xb70] sm:$0xff]
        %v657 = vld [vmem:[%s211 + $0xb78] sm:$0xff]
        %v658 = vld [vmem:[%s211 + $0xb80] sm:$0xff]
        %v659 = vld [vmem:[%s211 + $0xb88] sm:$0xff]
        %v660 = vld [vmem:[%s211 + $0xb90] sm:$0xff]
        %v661 = vld [vmem:[%s211 + $0xb98] sm:$0xff]
        %v662 = vld [vmem:[%s211 + $0xba0] sm:$0xff]
        %v663 = vld [vmem:[%s211 + $0xba8] sm:$0xff]
        %v664 = vld [vmem:[%s211 + $0xbb0] sm:$0xff]
        %v665 = vld [vmem:[%s211 + $0xbb8] sm:$0xff]
        %v666 = vld [vmem:[%s211 + $0xbc0] sm:$0xff]
        %v667 = vld [vmem:[%s211 + $0xbc8] sm:$0xff]
        %v668 = vld [vmem:[%s211 + $0xbd0] sm:$0xff]
        %v669 = vld [vmem:[%s211 + $0xbd8] sm:$0xff]
        %v670 = vld [vmem:[%s211 + $0xbe0] sm:$0xff]
        %v671 = vld [vmem:[%s211 + $0xbe8] sm:$0xff]
        %v672 = vld [vmem:[%s211 + $0xbf0] sm:$0xff]
        %v673 = vld [vmem:[%s211 + $0xbf8] sm:$0xff]
        %v674 = vld [vmem:[%s211 + $0xc00] sm:$0xff]
        %v675 = vld [vmem:[%s211 + $0xc08] sm:$0xff]
        %v676 = vld [vmem:[%s211 + $0xc10] sm:$0xff]
        %v677 = vld [vmem:[%s211 + $0xc18] sm:$0xff]
        %v678 = vld [vmem:[%s211 + $0xc20] sm:$0xff]
        %v679 = vld [vmem:[%s211 + $0xc28] sm:$0xff]
        %v680 = vld [vmem:[%s211 + $0xc30] sm:$0xff]
        %v681 = vld [vmem:[%s211 + $0xc38] sm:$0xff]
        %v682 = vld [vmem:[%s211 + $0xc40] sm:$0xff]
        %v683 = vld [vmem:[%s211 + $0xc48] sm:$0xff]
        %v684 = vld [vmem:[%s211 + $0xc50] sm:$0xff]
        %v685 = vld [vmem:[%s211 + $0xc58] sm:$0xff]
        %v686 = vld [vmem:[%s211 + $0xc60] sm:$0xff]
        %v687 = vld [vmem:[%s211 + $0xc68] sm:$0xff]
        %v688 = vld [vmem:[%s211 + $0xc70] sm:$0xff]
        %v689 = vld [vmem:[%s211 + $0xc78] sm:$0xff]
        %v690 = vld [vmem:[%s211 + $0xc80] sm:$0xff]
        %v691 = vld [vmem:[%s211 + $0xc88] sm:$0xff]
        %v692 = vld [vmem:[%s211 + $0xc90] sm:$0xff]
        %v693 = vld [vmem:[%s211 + $0xc98] sm:$0xff]
        %v694 = vld [vmem:[%s211 + $0xca0] sm:$0xff]
        %v695 = vld [vmem:[%s211 + $0xca8] sm:$0xff]
        %v696 = vld [vmem:[%s211 + $0xcb0] sm:$0xff]
        %v697 = vld [vmem:[%s211 + $0xcb8] sm:$0xff]
        %v698 = vld [vmem:[%s211 + $0xcc0] sm:$0xff]
        %v699 = vld [vmem:[%s211 + $0xcc8] sm:$0xff]
        %v700 = vld [vmem:[%s211 + $0xcd0] sm:$0xff]
        %v701 = vld [vmem:[%s211 + $0xcd8] sm:$0xff]
        %v702 = vld [vmem:[%s211 + $0xce0] sm:$0xff]
        %v703 = vld [vmem:[%s211 + $0xce8] sm:$0xff]
        %v704 = vld [vmem:[%s211 + $0xcf0] sm:$0xff]
        %v705 = vld [vmem:[%s211 + $0xcf8] sm:$0xff]
        %v706 = vld [vmem:[%s211 + $0xd00] sm:$0xff]
        %v707 = vld [vmem:[%s211 + $0xd08] sm:$0xff]
        %v708 = vld [vmem:[%s211 + $0xd10] sm:$0xff]
        %v709 = vld [vmem:[%s211 + $0xd18] sm:$0xff]
        %v710 = vld [vmem:[%s211 + $0xd20] sm:$0xff]
        %v711 = vld [vmem:[%s211 + $0xd28] sm:$0xff]
        %v712 = vld [vmem:[%s211 + $0xd30] sm:$0xff]
        %v713 = vld [vmem:[%s211 + $0xd38] sm:$0xff]
        %v714 = vld [vmem:[%s211 + $0xd40] sm:$0xff]
        %v715 = vld [vmem:[%s211 + $0xd48] sm:$0xff]
        %v716 = vld [vmem:[%s211 + $0xd50] sm:$0xff]
        %v717 = vld [vmem:[%s211 + $0xd58] sm:$0xff]
        %v718 = vld [vmem:[%s211 + $0xd60] sm:$0xff]
        %v719 = vld [vmem:[%s211 + $0xd68] sm:$0xff]
        %v720 = vld [vmem:[%s211 + $0xd70] sm:$0xff]
        %v721 = vld [vmem:[%s211 + $0xd78] sm:$0xff]
        %v722 = vld [vmem:[%s211 + $0xd80] sm:$0xff]
        %v723 = vld [vmem:[%s211 + $0xd88] sm:$0xff]
        %v724 = vld [vmem:[%s211 + $0xd90] sm:$0xff]
        %v725 = vld [vmem:[%s211 + $0xd98] sm:$0xff]
        %v726 = vld [vmem:[%s211 + $0xda0] sm:$0xff]
        %v727 = vld [vmem:[%s211 + $0xda8] sm:$0xff]
        %v728 = vld [vmem:[%s211 + $0xdb0] sm:$0xff]
        %v729 = vld [vmem:[%s211 + $0xdb8] sm:$0xff]
        %v730 = vld [vmem:[%s211 + $0xdc0] sm:$0xff]
        %v731 = vld [vmem:[%s211 + $0xdc8] sm:$0xff]
        %v732 = vld [vmem:[%s211 + $0xdd0] sm:$0xff]
        %v733 = vld [vmem:[%s211 + $0xdd8] sm:$0xff]
        %v734 = vld [vmem:[%s211 + $0xde0] sm:$0xff]
        %v735 = vld [vmem:[%s211 + $0xde8] sm:$0xff]
        %v736 = vld [vmem:[%s211 + $0xdf0] sm:$0xff]
        %v737 = vld [vmem:[%s211 + $0xdf8] sm:$0xff]
        %v738 = vld [vmem:[%s211 + $0xe00] sm:$0xff]
        %v739 = vld [vmem:[%s211 + $0xe08] sm:$0xff]
        %v740 = vld [vmem:[%s211 + $0xe10] sm:$0xff]
        %v741 = vld [vmem:[%s211 + $0xe18] sm:$0xff]
        %v742 = vld [vmem:[%s211 + $0xe20] sm:$0xff]
        %v743 = vld [vmem:[%s211 + $0xe28] sm:$0xff]
        %v744 = vld [vmem:[%s211 + $0xe30] sm:$0xff]
        %v745 = vld [vmem:[%s211 + $0xe38] sm:$0xff]
        %v746 = vld [vmem:[%s211 + $0xe40] sm:$0xff]
        %v747 = vld [vmem:[%s211 + $0xe48] sm:$0xff]
        %v748 = vld [vmem:[%s211 + $0xe50] sm:$0xff]
        %v749 = vld [vmem:[%s211 + $0xe58] sm:$0xff]
        %v750 = vld [vmem:[%s211 + $0xe60] sm:$0xff]
        %v751 = vld [vmem:[%s211 + $0xe68] sm:$0xff]
        %v752 = vld [vmem:[%s211 + $0xe70] sm:$0xff]
        %v753 = vld [vmem:[%s211 + $0xe78] sm:$0xff]
        %v754 = vld [vmem:[%s211 + $0xe80] sm:$0xff]
        %v755 = vld [vmem:[%s211 + $0xe88] sm:$0xff]
        %v756 = vld [vmem:[%s211 + $0xe90] sm:$0xff]
        %v757 = vld [vmem:[%s211 + $0xe98] sm:$0xff]
        %v758 = vld [vmem:[%s211 + $0xea0] sm:$0xff]
        %v759 = vld [vmem:[%s211 + $0xea8] sm:$0xff]
        %v760 = vld [vmem:[%s211 + $0xeb0] sm:$0xff]
        %v761 = vld [vmem:[%s211 + $0xeb8] sm:$0xff]
        %v762 = vld [vmem:[%s211 + $0xec0] sm:$0xff]
        %v763 = vld [vmem:[%s211 + $0xec8] sm:$0xff]
        %v764 = vld [vmem:[%s211 + $0xed0] sm:$0xff]
        %v765 = vld [vmem:[%s211 + $0xed8] sm:$0xff]
        %v766 = vld [vmem:[%s211 + $0xee0] sm:$0xff]
        %v767 = vld [vmem:[%s211 + $0xee8] sm:$0xff]
        %v768 = vld [vmem:[%s211 + $0xef0] sm:$0xff]
        %v769 = vld [vmem:[%s211 + $0xef8] sm:$0xff]
        %v770 = vld [vmem:[%s211 + $0xf00] sm:$0xff]
        %v771 = vld [vmem:[%s211 + $0xf08] sm:$0xff]
        %v772 = vld [vmem:[%s211 + $0xf10] sm:$0xff]
        %v773 = vld [vmem:[%s211 + $0xf18] sm:$0xff]
        %v774 = vld [vmem:[%s211 + $0xf20] sm:$0xff]
        %v775 = vld [vmem:[%s211 + $0xf28] sm:$0xff]
        %v776 = vld [vmem:[%s211 + $0xf30] sm:$0xff]
        %v777 = vld [vmem:[%s211 + $0xf38] sm:$0xff]
        %v778 = vld [vmem:[%s211 + $0xf40] sm:$0xff]
        %v779 = vld [vmem:[%s211 + $0xf48] sm:$0xff]
        %v780 = vld [vmem:[%s211 + $0xf50] sm:$0xff]
        %v781 = vld [vmem:[%s211 + $0xf58] sm:$0xff]
        %v782 = vld [vmem:[%s211 + $0xf60] sm:$0xff]
        %v783 = vld [vmem:[%s211 + $0xf68] sm:$0xff]
        %v784 = vld [vmem:[%s211 + $0xf70] sm:$0xff]
        %v785 = vld [vmem:[%s211 + $0xf78] sm:$0xff]
        %v786 = vld [vmem:[%s211 + $0xf80] sm:$0xff]
        %v787 = vld [vmem:[%s211 + $0xf88] sm:$0xff]
        %v788 = vld [vmem:[%s211 + $0xf90] sm:$0xff]
        %v789 = vld [vmem:[%s211 + $0xf98] sm:$0xff]
        %v790 = vld [vmem:[%s211 + $0xfa0] sm:$0xff]
        %v791 = vld [vmem:[%s211 + $0xfa8] sm:$0xff]
        %v792 = vld [vmem:[%s211 + $0xfb0] sm:$0xff]
        %v793 = vld [vmem:[%s211 + $0xfb8] sm:$0xff]
        %v794 = vld [vmem:[%s211 + $0xfc0] sm:$0xff]
        %v795 = vld [vmem:[%s211 + $0xfc8] sm:$0xff]
        %v796 = vld [vmem:[%s211 + $0xfd0] sm:$0xff]
        %v797 = vld [vmem:[%s211 + $0xfd8] sm:$0xff]
        %v798 = vld [vmem:[%s211 + $0xfe0] sm:$0xff]
        %v799 = vld [vmem:[%s211 + $0xfe8] sm:$0xff]
        %v800 = vld [vmem:[%s211 + $0xff0] sm:$0xff]
        %v801 = vld [vmem:[%s211 + $0xff8] sm:$0xff]
        %v802 = vld [vmem:[%s211 + $0x1000] sm:$0xff]
        %v803 = vld [vmem:[%s211 + $0x1008] sm:$0xff]
        %v804 = vld [vmem:[%s211 + $0x1010] sm:$0xff]
        %v805 = vld [vmem:[%s211 + $0x1018] sm:$0xff]
        %v806 = vld [vmem:[%s211 + $0x1020] sm:$0xff]
        %v807 = vld [vmem:[%s211 + $0x1028] sm:$0xff]
        %v808 = vld [vmem:[%s211 + $0x1030] sm:$0xff]
        %v809 = vld [vmem:[%s211 + $0x1038] sm:$0xff]
        %v810 = vld [vmem:[%s211 + $0x1040] sm:$0xff]
        %v811 = vld [vmem:[%s211 + $0x1048] sm:$0xff]
        %v812 = vld [vmem:[%s211 + $0x1050] sm:$0xff]
        %v813 = vld [vmem:[%s211 + $0x1058] sm:$0xff]
        %v814 = vld [vmem:[%s211 + $0x1060] sm:$0xff]
        %v815 = vld [vmem:[%s211 + $0x1068] sm:$0xff]
        %v816 = vld [vmem:[%s211 + $0x1070] sm:$0xff]
        %v817 = vld [vmem:[%s211 + $0x1078] sm:$0xff]
        %v818 = vld [vmem:[%s211 + $0x1080] sm:$0xff]
        %v819 = vld [vmem:[%s211 + $0x1088] sm:$0xff]
        %v820 = vld [vmem:[%s211 + $0x1090] sm:$0xff]
        %v821 = vld [vmem:[%s211 + $0x1098] sm:$0xff]
        %v822 = vld [vmem:[%s211 + $0x10a0] sm:$0xff]
        %v823 = vld [vmem:[%s211 + $0x10a8] sm:$0xff]
        %v824 = vld [vmem:[%s211 + $0x10b0] sm:$0xff]
        %v825 = vld [vmem:[%s211 + $0x10b8] sm:$0xff]
        %v826 = vld [vmem:[%s211 + $0x10c0] sm:$0xff]
        %v827 = vld [vmem:[%s211 + $0x10c8] sm:$0xff]
        %v828 = vld [vmem:[%s211 + $0x10d0] sm:$0xff]
        %v829 = vld [vmem:[%s211 + $0x10d8] sm:$0xff]
        %v830 = vld [vmem:[%s211 + $0x10e0] sm:$0xff]
        %v831 = vld [vmem:[%s211 + $0x10e8] sm:$0xff]
        %v832 = vld [vmem:[%s211 + $0x10f0] sm:$0xff]
        %v833 = vld [vmem:[%s211 + $0x10f8] sm:$0xff]
        %v834 = vld [vmem:[%s211 + $0x1100] sm:$0xff]
        %v835 = vld [vmem:[%s211 + $0x1108] sm:$0xff]
        %v836 = vld [vmem:[%s211 + $0x1110] sm:$0xff]
        %v837 = vld [vmem:[%s211 + $0x1118] sm:$0xff]
        %v838 = vld [vmem:[%s211 + $0x1120] sm:$0xff]
        %v839 = vld [vmem:[%s211 + $0x1128] sm:$0xff]
        %v840 = vld [vmem:[%s211 + $0x1130] sm:$0xff]
        %v841 = vld [vmem:[%s211 + $0x1138] sm:$0xff]
        %v842 = vld [vmem:[%s211 + $0x1140] sm:$0xff]
        %v843 = vld [vmem:[%s211 + $0x1148] sm:$0xff]
        %v844 = vld [vmem:[%s211 + $0x1150] sm:$0xff]
        %v845 = vld [vmem:[%s211 + $0x1158] sm:$0xff]
        %v846 = vld [vmem:[%s211 + $0x1160] sm:$0xff]
        %v847 = vld [vmem:[%s211 + $0x1168] sm:$0xff]
        %v848 = vld [vmem:[%s211 + $0x1170] sm:$0xff]
        %v849 = vld [vmem:[%s211 + $0x1178] sm:$0xff]
        %v850 = vld [vmem:[%s211 + $0x1180] sm:$0xff]
        %v851 = vld [vmem:[%s211 + $0x1188] sm:$0xff]
        %v852 = vld [vmem:[%s211 + $0x1190] sm:$0xff]
        %v853 = vld [vmem:[%s211 + $0x1198] sm:$0xff]
        %v854 = vld [vmem:[%s211 + $0x11a0] sm:$0xff]
        %v855 = vld [vmem:[%s211 + $0x11a8] sm:$0xff]
        %v856 = vld [vmem:[%s211 + $0x11b0] sm:$0xff]
        %v857 = vld [vmem:[%s211 + $0x11b8] sm:$0xff]
        %v858 = vld [vmem:[%s211 + $0x11c0] sm:$0xff]
        %v859 = vld [vmem:[%s211 + $0x11c8] sm:$0xff]
        %v860 = vld [vmem:[%s211 + $0x11d0] sm:$0xff]
        %v861 = vld [vmem:[%s211 + $0x11d8] sm:$0xff]
        %v862 = vld [vmem:[%s211 + $0x11e0] sm:$0xff]
        %v863 = vld [vmem:[%s211 + $0x11e8] sm:$0xff]
        %v864 = vld [vmem:[%s211 + $0x11f0] sm:$0xff]
        %v865 = vld [vmem:[%s211 + $0x11f8] sm:$0xff]
        %v866 = vld [vmem:[%s211 + $0x1200] sm:$0xff]
        %v867 = vld [vmem:[%s211 + $0x1208] sm:$0xff]
        %v868 = vld [vmem:[%s211 + $0x1210] sm:$0xff]
        %v869 = vld [vmem:[%s211 + $0x1218] sm:$0xff]
        %v870 = vld [vmem:[%s211 + $0x1220] sm:$0xff]
        %v871 = vld [vmem:[%s211 + $0x1228] sm:$0xff]
        %v872 = vld [vmem:[%s211 + $0x1230] sm:$0xff]
        %v873 = vld [vmem:[%s211 + $0x1238] sm:$0xff]
        %v874 = vld [vmem:[%s211 + $0x1240] sm:$0xff]
        %v875 = vld [vmem:[%s211 + $0x1248] sm:$0xff]
        %v876 = vld [vmem:[%s211 + $0x1250] sm:$0xff]
        %v877 = vld [vmem:[%s211 + $0x1258] sm:$0xff]
        %v878 = vld [vmem:[%s211 + $0x1260] sm:$0xff]
        %v879 = vld [vmem:[%s211 + $0x1268] sm:$0xff]
        %v880 = vld [vmem:[%s211 + $0x1270] sm:$0xff]
        %v881 = vld [vmem:[%s211 + $0x1278] sm:$0xff]
        %v882 = vld [vmem:[%s211 + $0x1280] sm:$0xff]
        %v883 = vld [vmem:[%s211 + $0x1288] sm:$0xff]
        %v884 = vld [vmem:[%s211 + $0x1290] sm:$0xff]
        %v885 = vld [vmem:[%s211 + $0x1298] sm:$0xff]
        %v886 = vld [vmem:[%s211 + $0x12a0] sm:$0xff]
        %v887 = vld [vmem:[%s211 + $0x12a8] sm:$0xff]
        %v888 = vld [vmem:[%s211 + $0x12b0] sm:$0xff]
        %v889 = vld [vmem:[%s211 + $0x12b8] sm:$0xff]
        %v890 = vld [vmem:[%s211 + $0x12c0] sm:$0xff]
        %v891 = vld [vmem:[%s211 + $0x12c8] sm:$0xff]
        %v892 = vld [vmem:[%s211 + $0x12d0] sm:$0xff]
        %v893 = vld [vmem:[%s211 + $0x12d8] sm:$0xff]
        %v894 = vld [vmem:[%s211 + $0x12e0] sm:$0xff]
        %v895 = vld [vmem:[%s211 + $0x12e8] sm:$0xff]
        %v896 = vld [vmem:[%s211 + $0x12f0] sm:$0xff]
        %v897 = vld [vmem:[%s211 + $0x12f8] sm:$0xff]
        %v898 = vld [vmem:[%s211 + $0x1300] sm:$0xff]
        %v899 = vld [vmem:[%s211 + $0x1308] sm:$0xff]
        %v900 = vld [vmem:[%s211 + $0x1310] sm:$0xff]
        %v901 = vld [vmem:[%s211 + $0x1318] sm:$0xff]
        %v902 = vld [vmem:[%s211 + $0x1320] sm:$0xff]
        %v903 = vld [vmem:[%s211 + $0x1328] sm:$0xff]
        %v904 = vld [vmem:[%s211 + $0x1330] sm:$0xff]
        %v905 = vld [vmem:[%s211 + $0x1338] sm:$0xff]
        %v906 = vld [vmem:[%s211 + $0x1340] sm:$0xff]
        %v907 = vld [vmem:[%s211 + $0x1348] sm:$0xff]
        %v908 = vld [vmem:[%s211 + $0x1350] sm:$0xff]
        %v909 = vld [vmem:[%s211 + $0x1358] sm:$0xff]
        %v910 = vld [vmem:[%s211 + $0x1360] sm:$0xff]
        %v911 = vld [vmem:[%s211 + $0x1368] sm:$0xff]
        %v912 = vld [vmem:[%s211 + $0x1370] sm:$0xff]
        %v913 = vld [vmem:[%s211 + $0x1378] sm:$0xff]
        %v914 = vld [vmem:[%s211 + $0x1380] sm:$0xff]
        %v915 = vld [vmem:[%s211 + $0x1388] sm:$0xff]
        %v916 = vld [vmem:[%s211 + $0x1390] sm:$0xff]
        %v917 = vld [vmem:[%s211 + $0x1398] sm:$0xff]
        %v918 = vld [vmem:[%s211 + $0x13a0] sm:$0xff]
        %v919 = vld [vmem:[%s211 + $0x13a8] sm:$0xff]
        %v920 = vld [vmem:[%s211 + $0x13b0] sm:$0xff]
        %v921 = vld [vmem:[%s211 + $0x13b8] sm:$0xff]
        %v922 = vld [vmem:[%s211 + $0x13c0] sm:$0xff]
        %v923 = vld [vmem:[%s211 + $0x13c8] sm:$0xff]
        %v924 = vld [vmem:[%s211 + $0x13d0] sm:$0xff]
        %v925 = vld [vmem:[%s211 + $0x13d8] sm:$0xff]
        %v926 = vld [vmem:[%s211 + $0x13e0] sm:$0xff]
        %v927 = vld [vmem:[%s211 + $0x13e8] sm:$0xff]
        %v928 = vld [vmem:[%s211 + $0x13f0] sm:$0xff]
        %v929 = vld [vmem:[%s211 + $0x13f8] sm:$0xff]
        %v930 = vld [vmem:[%s211 + $0x1400] sm:$0xff]
        %v931 = vld [vmem:[%s211 + $0x1408] sm:$0xff]
        %v932 = vld [vmem:[%s211 + $0x1410] sm:$0xff]
        %v933 = vld [vmem:[%s211 + $0x1418] sm:$0xff]
        %v934 = vld [vmem:[%s211 + $0x1420] sm:$0xff]
        %v935 = vld [vmem:[%s211 + $0x1428] sm:$0xff]
        %v936 = vld [vmem:[%s211 + $0x1430] sm:$0xff]
        %v937 = vld [vmem:[%s211 + $0x1438] sm:$0xff]
        %v938 = vld [vmem:[%s211 + $0x1440] sm:$0xff]
        %v939 = vld [vmem:[%s211 + $0x1448] sm:$0xff]
        %v940 = vld [vmem:[%s211 + $0x1450] sm:$0xff]
        %v941 = vld [vmem:[%s211 + $0x1458] sm:$0xff]
        %v942 = vld [vmem:[%s211 + $0x1460] sm:$0xff]
        %v943 = vld [vmem:[%s211 + $0x1468] sm:$0xff]
        %v944 = vld [vmem:[%s211 + $0x1470] sm:$0xff]
        %v945 = vld [vmem:[%s211 + $0x1478] sm:$0xff]
        %v946 = vld [vmem:[%s211 + $0x1480] sm:$0xff]
        %v947 = vld [vmem:[%s211 + $0x1488] sm:$0xff]
        %v948 = vld [vmem:[%s211 + $0x1490] sm:$0xff]
        %v949 = vld [vmem:[%s211 + $0x1498] sm:$0xff]
        %v950 = vld [vmem:[%s211 + $0x14a0] sm:$0xff]
        %v951 = vld [vmem:[%s211 + $0x14a8] sm:$0xff]
        %v952 = vld [vmem:[%s211 + $0x14b0] sm:$0xff]
        %v953 = vld [vmem:[%s211 + $0x14b8] sm:$0xff]
        %v954 = vld [vmem:[%s211 + $0x14c0] sm:$0xff]
        %v955 = vld [vmem:[%s211 + $0x14c8] sm:$0xff]
        %v956 = vld [vmem:[%s211 + $0x14d0] sm:$0xff]
        %v957 = vld [vmem:[%s211 + $0x14d8] sm:$0xff]
        %v958 = vld [vmem:[%s211 + $0x14e0] sm:$0xff]
        %v959 = vld [vmem:[%s211 + $0x14e8] sm:$0xff]
        %v960 = vld [vmem:[%s211 + $0x14f0] sm:$0xff]
        %v961 = vld [vmem:[%s211 + $0x14f8] sm:$0xff]
        %v962 = vld [vmem:[%s211 + $0x1500] sm:$0xff]
        %v963 = vld [vmem:[%s211 + $0x1508] sm:$0xff]
        %v964 = vld [vmem:[%s211 + $0x1510] sm:$0xff]
        %v965 = vld [vmem:[%s211 + $0x1518] sm:$0xff]
        %v966 = vld [vmem:[%s211 + $0x1520] sm:$0xff]
        %v967 = vld [vmem:[%s211 + $0x1528] sm:$0xff]
        %v968 = vld [vmem:[%s211 + $0x1530] sm:$0xff]
        %v969 = vld [vmem:[%s211 + $0x1538] sm:$0xff]
        %v970 = vld [vmem:[%s211 + $0x1540] sm:$0xff]
        %v971 = vld [vmem:[%s211 + $0x1548] sm:$0xff]
        %v972 = vld [vmem:[%s211 + $0x1550] sm:$0xff]
        %v973 = vld [vmem:[%s211 + $0x1558] sm:$0xff]
        %v974 = vld [vmem:[%s211 + $0x1560] sm:$0xff]
        %v975 = vld [vmem:[%s211 + $0x1568] sm:$0xff]
        %v976 = vld [vmem:[%s211 + $0x1570] sm:$0xff]
        %v977 = vld [vmem:[%s211 + $0x1578] sm:$0xff]
        %v978 = vld [vmem:[%s211 + $0x1580] sm:$0xff]
        %v979 = vld [vmem:[%s211 + $0x1588] sm:$0xff]
        %v980 = vld [vmem:[%s211 + $0x1590] sm:$0xff]
        %v981 = vld [vmem:[%s211 + $0x1598] sm:$0xff]
        %v982 = vld [vmem:[%s211 + $0x15a0] sm:$0xff]
        %v983 = vld [vmem:[%s211 + $0x15a8] sm:$0xff]
        %v984 = vld [vmem:[%s211 + $0x15b0] sm:$0xff]
        %v985 = vld [vmem:[%s211 + $0x15b8] sm:$0xff]
        %v986 = vld [vmem:[%s211 + $0x15c0] sm:$0xff]
        %v987 = vld [vmem:[%s211 + $0x15c8] sm:$0xff]
        %v988 = vld [vmem:[%s211 + $0x15d0] sm:$0xff]
        %v989 = vld [vmem:[%s211 + $0x15d8] sm:$0xff]
        %v990 = vld [vmem:[%s211 + $0x15e0] sm:$0xff]
        %v991 = vld [vmem:[%s211 + $0x15e8] sm:$0xff]
        %v992 = vld [vmem:[%s211 + $0x15f0] sm:$0xff]
        %v993 = vld [vmem:[%s211 + $0x15f8] sm:$0xff]
        %v994 = vld [vmem:[%s211 + $0x1600] sm:$0xff]
        %v995 = vld [vmem:[%s211 + $0x1608] sm:$0xff]
        %v996 = vld [vmem:[%s211 + $0x1610] sm:$0xff]
        %v997 = vld [vmem:[%s211 + $0x1618] sm:$0xff]
        %v998 = vld [vmem:[%s211 + $0x1620] sm:$0xff]
        %v999 = vld [vmem:[%s211 + $0x1628] sm:$0xff]
        %v1000 = vld [vmem:[%s211 + $0x1630] sm:$0xff]
        %v1001 = vld [vmem:[%s211 + $0x1638] sm:$0xff]
        %v1002 = vld [vmem:[%s211 + $0x1640] sm:$0xff]
        %v1003 = vld [vmem:[%s211 + $0x1648] sm:$0xff]
        %v1004 = vld [vmem:[%s211 + $0x1650] sm:$0xff]
        %v1005 = vld [vmem:[%s211 + $0x1658] sm:$0xff]
        %v1006 = vld [vmem:[%s211 + $0x1660] sm:$0xff]
        %v1007 = vld [vmem:[%s211 + $0x1668] sm:$0xff]
        %v1008 = vld [vmem:[%s211 + $0x1670] sm:$0xff]
        %v1009 = vld [vmem:[%s211 + $0x1678] sm:$0xff]
        %v1010 = vld [vmem:[%s211 + $0x1680] sm:$0xff]
        %v1011 = vld [vmem:[%s211 + $0x1688] sm:$0xff]
        %v1012 = vld [vmem:[%s211 + $0x1690] sm:$0xff]
        %v1013 = vld [vmem:[%s211 + $0x1698] sm:$0xff]
        %v1014 = vld [vmem:[%s211 + $0x16a0] sm:$0xff]
        %v1015 = vld [vmem:[%s211 + $0x16a8] sm:$0xff]
        %v1016 = vld [vmem:[%s211 + $0x16b0] sm:$0xff]
        %v1017 = vld [vmem:[%s211 + $0x16b8] sm:$0xff]
        %v1018 = vld [vmem:[%s211 + $0x16c0] sm:$0xff]
        %v1019 = vld [vmem:[%s211 + $0x16c8] sm:$0xff]
        %v1020 = vld [vmem:[%s211 + $0x16d0] sm:$0xff]
        %v1021 = vld [vmem:[%s211 + $0x16d8] sm:$0xff]
        %v1022 = vld [vmem:[%s211 + $0x16e0] sm:$0xff]
        %v1023 = vld [vmem:[%s211 + $0x16e8] sm:$0xff]
        %v1024 = vld [vmem:[%s211 + $0x16f0] sm:$0xff]
        %v1025 = vld [vmem:[%s211 + $0x16f8] sm:$0xff]
        %v1026 = vld [vmem:[%s211 + $0x1700] sm:$0xff]
        %v1027 = vld [vmem:[%s211 + $0x1708] sm:$0xff]
        %v1028 = vld [vmem:[%s211 + $0x1710] sm:$0xff]
        %v1029 = vld [vmem:[%s211 + $0x1718] sm:$0xff]
        %v1030 = vld [vmem:[%s211 + $0x1720] sm:$0xff]
        %v1031 = vld [vmem:[%s211 + $0x1728] sm:$0xff]
        %v1032 = vld [vmem:[%s211 + $0x1730] sm:$0xff]
        %v1033 = vld [vmem:[%s211 + $0x1738] sm:$0xff]
        %v1034 = vld [vmem:[%s211 + $0x1740] sm:$0xff]
        %v1035 = vld [vmem:[%s211 + $0x1748] sm:$0xff]
        %v1036 = vld [vmem:[%s211 + $0x1750] sm:$0xff]
        %v1037 = vld [vmem:[%s211 + $0x1758] sm:$0xff]
        %v1038 = vld [vmem:[%s211 + $0x1760] sm:$0xff]
        %v1039 = vld [vmem:[%s211 + $0x1768] sm:$0xff]
        %v1040 = vld [vmem:[%s211 + $0x1770] sm:$0xff]
        %v1041 = vld [vmem:[%s211 + $0x1778] sm:$0xff]
        %v1042 = vld [vmem:[%s211 + $0x1780] sm:$0xff]
        %v1043 = vld [vmem:[%s211 + $0x1788] sm:$0xff]
        %v1044 = vld [vmem:[%s211 + $0x1790] sm:$0xff]
        %v1045 = vld [vmem:[%s211 + $0x1798] sm:$0xff]
        %v1046 = vld [vmem:[%s211 + $0x17a0] sm:$0xff]
        %v1047 = vld [vmem:[%s211 + $0x17a8] sm:$0xff]
        %v1048 = vld [vmem:[%s211 + $0x17b0] sm:$0xff]
        %v1049 = vld [vmem:[%s211 + $0x17b8] sm:$0xff]
        %v1050 = vld [vmem:[%s211 + $0x17c0] sm:$0xff]
        %v1051 = vld [vmem:[%s211 + $0x17c8] sm:$0xff]
        %v1052 = vld [vmem:[%s211 + $0x17d0] sm:$0xff]
        %v1053 = vld [vmem:[%s211 + $0x17d8] sm:$0xff]
        %v1054 = vld [vmem:[%s211 + $0x17e0] sm:$0xff]
        %v1055 = vld [vmem:[%s211 + $0x17e8] sm:$0xff]
        %v1056 = vld [vmem:[%s211 + $0x17f0] sm:$0xff]
        %v1057 = vld [vmem:[%s211 + $0x17f8] sm:$0xff]
        %v1058 = vld [vmem:[%s211 + $0x1800] sm:$0xff]
        %v1059 = vld [vmem:[%s211 + $0x1808] sm:$0xff]
        %v1060 = vld [vmem:[%s211 + $0x1810] sm:$0xff]
        %v1061 = vld [vmem:[%s211 + $0x1818] sm:$0xff]
        %v1062 = vld [vmem:[%s211 + $0x1820] sm:$0xff]
        %v1063 = vld [vmem:[%s211 + $0x1828] sm:$0xff]
        %v1064 = vld [vmem:[%s211 + $0x1830] sm:$0xff]
        %v1065 = vld [vmem:[%s211 + $0x1838] sm:$0xff]
        %v1066 = vld [vmem:[%s211 + $0x1840] sm:$0xff]
        %v1067 = vld [vmem:[%s211 + $0x1848] sm:$0xff]
        %v1068 = vld [vmem:[%s211 + $0x1850] sm:$0xff]
        %v1069 = vld [vmem:[%s211 + $0x1858] sm:$0xff]
        %v1070 = vld [vmem:[%s211 + $0x1860] sm:$0xff]
        %v1071 = vld [vmem:[%s211 + $0x1868] sm:$0xff]
        %v1072 = vld [vmem:[%s211 + $0x1870] sm:$0xff]
        %v1073 = vld [vmem:[%s211 + $0x1878] sm:$0xff]
        %v1074 = vld [vmem:[%s211 + $0x1880] sm:$0xff]
        %v1075 = vld [vmem:[%s211 + $0x1888] sm:$0xff]
        %v1076 = vld [vmem:[%s211 + $0x1890] sm:$0xff]
        %v1077 = vld [vmem:[%s211 + $0x1898] sm:$0xff]
        %v1078 = vld [vmem:[%s211 + $0x18a0] sm:$0xff]
        %v1079 = vld [vmem:[%s211 + $0x18a8] sm:$0xff]
        %v1080 = vld [vmem:[%s211 + $0x18b0] sm:$0xff]
        %v1081 = vld [vmem:[%s211 + $0x18b8] sm:$0xff]
        %v1082 = vld [vmem:[%s211 + $0x18c0] sm:$0xff]
        %v1083 = vld [vmem:[%s211 + $0x18c8] sm:$0xff]
        %v1084 = vld [vmem:[%s211 + $0x18d0] sm:$0xff]
        %v1085 = vld [vmem:[%s211 + $0x18d8] sm:$0xff]
        %v1086 = vld [vmem:[%s211 + $0x18e0] sm:$0xff]
        %v1087 = vld [vmem:[%s211 + $0x18e8] sm:$0xff]
        %v1088 = vld [vmem:[%s211 + $0x18f0] sm:$0xff]
        %v1089 = vld [vmem:[%s211 + $0x18f8] sm:$0xff]
        %v1090 = vld [vmem:[%s211 + $0x1900] sm:$0xff]
        %v1091 = vld [vmem:[%s211 + $0x1908] sm:$0xff]
        %v1092 = vld [vmem:[%s211 + $0x1910] sm:$0xff]
        %v1093 = vld [vmem:[%s211 + $0x1918] sm:$0xff]
        %v1094 = vld [vmem:[%s211 + $0x1920] sm:$0xff]
        %v1095 = vld [vmem:[%s211 + $0x1928] sm:$0xff]
        %v1096 = vld [vmem:[%s211 + $0x1930] sm:$0xff]
        %v1097 = vld [vmem:[%s211 + $0x1938] sm:$0xff]
        %v1098 = vld [vmem:[%s211 + $0x1940] sm:$0xff]
        %v1099 = vld [vmem:[%s211 + $0x1948] sm:$0xff]
        %v1100 = vld [vmem:[%s211 + $0x1950] sm:$0xff]
        %v1101 = vld [vmem:[%s211 + $0x1958] sm:$0xff]
        %v1102 = vld [vmem:[%s211 + $0x1960] sm:$0xff]
        %v1103 = vld [vmem:[%s211 + $0x1968] sm:$0xff]
        %v1104 = vld [vmem:[%s211 + $0x1970] sm:$0xff]
        %v1105 = vld [vmem:[%s211 + $0x1978] sm:$0xff]
        %v1106 = vld [vmem:[%s211 + $0x1980] sm:$0xff]
        %v1107 = vld [vmem:[%s211 + $0x1988] sm:$0xff]
        %v1108 = vld [vmem:[%s211 + $0x1990] sm:$0xff]
        %v1109 = vld [vmem:[%s211 + $0x1998] sm:$0xff]
        %v1110 = vld [vmem:[%s211 + $0x19a0] sm:$0xff]
        %v1111 = vld [vmem:[%s211 + $0x19a8] sm:$0xff]
        %v1112 = vld [vmem:[%s211 + $0x19b0] sm:$0xff]
        %v1113 = vld [vmem:[%s211 + $0x19b8] sm:$0xff]
        %v1114 = vld [vmem:[%s211 + $0x19c0] sm:$0xff]
        %v1115 = vld [vmem:[%s211 + $0x19c8] sm:$0xff]
        %v1116 = vld [vmem:[%s211 + $0x19d0] sm:$0xff]
        %v1117 = vld [vmem:[%s211 + $0x19d8] sm:$0xff]
        %v1118 = vld [vmem:[%s211 + $0x19e0] sm:$0xff]
        %v1119 = vld [vmem:[%s211 + $0x19e8] sm:$0xff]
        %v1120 = vld [vmem:[%s211 + $0x19f0] sm:$0xff]
        %v1121 = vld [vmem:[%s211 + $0x19f8] sm:$0xff]
        %v1122 = vld [vmem:[%s211 + $0x1a00] sm:$0xff]
        %v1123 = vld [vmem:[%s211 + $0x1a08] sm:$0xff]
        %v1124 = vld [vmem:[%s211 + $0x1a10] sm:$0xff]
        %v1125 = vld [vmem:[%s211 + $0x1a18] sm:$0xff]
        %v1126 = vld [vmem:[%s211 + $0x1a20] sm:$0xff]
        %v1127 = vld [vmem:[%s211 + $0x1a28] sm:$0xff]
        %v1128 = vld [vmem:[%s211 + $0x1a30] sm:$0xff]
        %v1129 = vld [vmem:[%s211 + $0x1a38] sm:$0xff]
        %v1130 = vld [vmem:[%s211 + $0x1a40] sm:$0xff]
        %v1131 = vld [vmem:[%s211 + $0x1a48] sm:$0xff]
        %v1132 = vld [vmem:[%s211 + $0x1a50] sm:$0xff]
        %v1133 = vld [vmem:[%s211 + $0x1a58] sm:$0xff]
        %v1134 = vld [vmem:[%s211 + $0x1a60] sm:$0xff]
        %v1135 = vld [vmem:[%s211 + $0x1a68] sm:$0xff]
        %v1136 = vld [vmem:[%s211 + $0x1a70] sm:$0xff]
        %v1137 = vld [vmem:[%s211 + $0x1a78] sm:$0xff]
        %v1138 = vld [vmem:[%s211 + $0x1a80] sm:$0xff]
        %v1139 = vld [vmem:[%s211 + $0x1a88] sm:$0xff]
        %v1140 = vld [vmem:[%s211 + $0x1a90] sm:$0xff]
        %v1141 = vld [vmem:[%s211 + $0x1a98] sm:$0xff]
        %v1142 = vld [vmem:[%s211 + $0x1aa0] sm:$0xff]
        %v1143 = vld [vmem:[%s211 + $0x1aa8] sm:$0xff]
        %v1144 = vld [vmem:[%s211 + $0x1ab0] sm:$0xff]
        %v1145 = vld [vmem:[%s211 + $0x1ab8] sm:$0xff]
        %v1146 = vld [vmem:[%s211 + $0x1ac0] sm:$0xff]
        %v1147 = vld [vmem:[%s211 + $0x1ac8] sm:$0xff]
        %v1148 = vld [vmem:[%s211 + $0x1ad0] sm:$0xff]
        %v1149 = vld [vmem:[%s211 + $0x1ad8] sm:$0xff]
        %v1150 = vld [vmem:[%s211 + $0x1ae0] sm:$0xff]
        %v1151 = vld [vmem:[%s211 + $0x1ae8] sm:$0xff]
        %v1152 = vld [vmem:[%s211 + $0x1af0] sm:$0xff]
        %v1153 = vld [vmem:[%s211 + $0x1af8] sm:$0xff]
        %v1154 = vld [vmem:[%s211 + $0x1b00] sm:$0xff]
        %v1155 = vld [vmem:[%s211 + $0x1b08] sm:$0xff]
        %v1156 = vld [vmem:[%s211 + $0x1b10] sm:$0xff]
        %v1157 = vld [vmem:[%s211 + $0x1b18] sm:$0xff]
        %v1158 = vld [vmem:[%s211 + $0x1b20] sm:$0xff]
        %v1159 = vld [vmem:[%s211 + $0x1b28] sm:$0xff]
        %v1160 = vld [vmem:[%s211 + $0x1b30] sm:$0xff]
        %v1161 = vld [vmem:[%s211 + $0x1b38] sm:$0xff]
        %v1162 = vld [vmem:[%s211 + $0x1b40] sm:$0xff]
        %v1163 = vld [vmem:[%s211 + $0x1b48] sm:$0xff]
        %v1164 = vld [vmem:[%s211 + $0x1b50] sm:$0xff]
        %v1165 = vld [vmem:[%s211 + $0x1b58] sm:$0xff]
        %v1166 = vld [vmem:[%s211 + $0x1b60] sm:$0xff]
        %v1167 = vld [vmem:[%s211 + $0x1b68] sm:$0xff]
        %v1168 = vld [vmem:[%s211 + $0x1b70] sm:$0xff]
        %v1169 = vld [vmem:[%s211 + $0x1b78] sm:$0xff]
        %v1170 = vld [vmem:[%s211 + $0x1b80] sm:$0xff]
        %v1171 = vld [vmem:[%s211 + $0x1b88] sm:$0xff]
        %v1172 = vld [vmem:[%s211 + $0x1b90] sm:$0xff]
        %v1173 = vld [vmem:[%s211 + $0x1b98] sm:$0xff]
        %v1174 = vld [vmem:[%s211 + $0x1ba0] sm:$0xff]
        %v1175 = vld [vmem:[%s211 + $0x1ba8] sm:$0xff]
        %v1176 = vld [vmem:[%s211 + $0x1bb0] sm:$0xff]
        %v1177 = vld [vmem:[%s211 + $0x1bb8] sm:$0xff]
        %v1178 = vld [vmem:[%s211 + $0x1bc0] sm:$0xff]
        %v1179 = vld [vmem:[%s211 + $0x1bc8] sm:$0xff]
        %v1180 = vld [vmem:[%s211 + $0x1bd0] sm:$0xff]
        %v1181 = vld [vmem:[%s211 + $0x1bd8] sm:$0xff]
        %v1182 = vld [vmem:[%s211 + $0x1be0] sm:$0xff]
        %v1183 = vld [vmem:[%s211 + $0x1be8] sm:$0xff]
        %v1184 = vld [vmem:[%s211 + $0x1bf0] sm:$0xff]
        %v1185 = vld [vmem:[%s211 + $0x1bf8] sm:$0xff]
        %v1186 = vld [vmem:[%s211 + $0x1c00] sm:$0xff]
        %v1187 = vld [vmem:[%s211 + $0x1c08] sm:$0xff]
        %v1188 = vld [vmem:[%s211 + $0x1c10] sm:$0xff]
        %v1189 = vld [vmem:[%s211 + $0x1c18] sm:$0xff]
        %v1190 = vld [vmem:[%s211 + $0x1c20] sm:$0xff]
        %v1191 = vld [vmem:[%s211 + $0x1c28] sm:$0xff]
        %v1192 = vld [vmem:[%s211 + $0x1c30] sm:$0xff]
        %v1193 = vld [vmem:[%s211 + $0x1c38] sm:$0xff]
        %v1194 = vld [vmem:[%s211 + $0x1c40] sm:$0xff]
        %v1195 = vld [vmem:[%s211 + $0x1c48] sm:$0xff]
        %v1196 = vld [vmem:[%s211 + $0x1c50] sm:$0xff]
        %v1197 = vld [vmem:[%s211 + $0x1c58] sm:$0xff]
        %v1198 = vld [vmem:[%s211 + $0x1c60] sm:$0xff]
        %v1199 = vld [vmem:[%s211 + $0x1c68] sm:$0xff]
        %v1200 = vld [vmem:[%s211 + $0x1c70] sm:$0xff]
        %v1201 = vld [vmem:[%s211 + $0x1c78] sm:$0xff]
        %v1202 = vld [vmem:[%s211 + $0x1c80] sm:$0xff]
        %v1203 = vld [vmem:[%s211 + $0x1c88] sm:$0xff]
        %v1204 = vld [vmem:[%s211 + $0x1c90] sm:$0xff]
        %v1205 = vld [vmem:[%s211 + $0x1c98] sm:$0xff]
        %v1206 = vld [vmem:[%s211 + $0x1ca0] sm:$0xff]
        %v1207 = vld [vmem:[%s211 + $0x1ca8] sm:$0xff]
        %v1208 = vld [vmem:[%s211 + $0x1cb0] sm:$0xff]
        %v1209 = vld [vmem:[%s211 + $0x1cb8] sm:$0xff]
        %v1210 = vld [vmem:[%s211 + $0x1cc0] sm:$0xff]
        %v1211 = vld [vmem:[%s211 + $0x1cc8] sm:$0xff]
        %v1212 = vld [vmem:[%s211 + $0x1cd0] sm:$0xff]
        %v1213 = vld [vmem:[%s211 + $0x1cd8] sm:$0xff]
        %v1214 = vld [vmem:[%s211 + $0x1ce0] sm:$0xff]
        %v1215 = vld [vmem:[%s211 + $0x1ce8] sm:$0xff]
        %v1216 = vld [vmem:[%s211 + $0x1cf0] sm:$0xff]
        %v1217 = vld [vmem:[%s211 + $0x1cf8] sm:$0xff]
        %v1218 = vld [vmem:[%s211 + $0x1d00] sm:$0xff]
        %v1219 = vld [vmem:[%s211 + $0x1d08] sm:$0xff]
        %v1220 = vld [vmem:[%s211 + $0x1d10] sm:$0xff]
        %v1221 = vld [vmem:[%s211 + $0x1d18] sm:$0xff]
        %v1222 = vld [vmem:[%s211 + $0x1d20] sm:$0xff]
        %v1223 = vld [vmem:[%s211 + $0x1d28] sm:$0xff]
        %v1224 = vld [vmem:[%s211 + $0x1d30] sm:$0xff]
        %v1225 = vld [vmem:[%s211 + $0x1d38] sm:$0xff]
        %v1226 = vld [vmem:[%s211 + $0x1d40] sm:$0xff]
        %v1227 = vld [vmem:[%s211 + $0x1d48] sm:$0xff]
        %v1228 = vld [vmem:[%s211 + $0x1d50] sm:$0xff]
        %v1229 = vld [vmem:[%s211 + $0x1d58] sm:$0xff]
        %v1230 = vld [vmem:[%s211 + $0x1d60] sm:$0xff]
        %v1231 = vld [vmem:[%s211 + $0x1d68] sm:$0xff]
        %v1232 = vld [vmem:[%s211 + $0x1d70] sm:$0xff]
        %v1233 = vld [vmem:[%s211 + $0x1d78] sm:$0xff]
        %v1234 = vld [vmem:[%s211 + $0x1d80] sm:$0xff]
        %v1235 = vld [vmem:[%s211 + $0x1d88] sm:$0xff]
        %v1236 = vld [vmem:[%s211 + $0x1d90] sm:$0xff]
        %v1237 = vld [vmem:[%s211 + $0x1d98] sm:$0xff]
        %v1238 = vld [vmem:[%s211 + $0x1da0] sm:$0xff]
        %v1239 = vld [vmem:[%s211 + $0x1da8] sm:$0xff]
        %v1240 = vld [vmem:[%s211 + $0x1db0] sm:$0xff]
        %v1241 = vld [vmem:[%s211 + $0x1db8] sm:$0xff]
        %v1242 = vld [vmem:[%s211 + $0x1dc0] sm:$0xff]
        %v1243 = vld [vmem:[%s211 + $0x1dc8] sm:$0xff]
        %v1244 = vld [vmem:[%s211 + $0x1dd0] sm:$0xff]
        %v1245 = vld [vmem:[%s211 + $0x1dd8] sm:$0xff]
        %v1246 = vld [vmem:[%s211 + $0x1de0] sm:$0xff]
        %v1247 = vld [vmem:[%s211 + $0x1de8] sm:$0xff]
        %v1248 = vld [vmem:[%s211 + $0x1df0] sm:$0xff]
        %v1249 = vld [vmem:[%s211 + $0x1df8] sm:$0xff]
        %v1250 = vld [vmem:[%s211 + $0x1e00] sm:$0xff]
        %v1251 = vld [vmem:[%s211 + $0x1e08] sm:$0xff]
        %v1252 = vld [vmem:[%s211 + $0x1e10] sm:$0xff]
        %v1253 = vld [vmem:[%s211 + $0x1e18] sm:$0xff]
        %v1254 = vld [vmem:[%s211 + $0x1e20] sm:$0xff]
        %v1255 = vld [vmem:[%s211 + $0x1e28] sm:$0xff]
        %v1256 = vld [vmem:[%s211 + $0x1e30] sm:$0xff]
        %v1257 = vld [vmem:[%s211 + $0x1e38] sm:$0xff]
        %v1258 = vld [vmem:[%s211 + $0x1e40] sm:$0xff]
        %v1259 = vld [vmem:[%s211 + $0x1e48] sm:$0xff]
        %v1260 = vld [vmem:[%s211 + $0x1e50] sm:$0xff]
        %v1261 = vld [vmem:[%s211 + $0x1e58] sm:$0xff]
        %v1262 = vld [vmem:[%s211 + $0x1e60] sm:$0xff]
        %v1263 = vld [vmem:[%s211 + $0x1e68] sm:$0xff]
        %v1264 = vld [vmem:[%s211 + $0x1e70] sm:$0xff]
        %v1265 = vld [vmem:[%s211 + $0x1e78] sm:$0xff]
        %v1266 = vld [vmem:[%s211 + $0x1e80] sm:$0xff]
        %v1267 = vld [vmem:[%s211 + $0x1e88] sm:$0xff]
        %v1268 = vld [vmem:[%s211 + $0x1e90] sm:$0xff]
        %v1269 = vld [vmem:[%s211 + $0x1e98] sm:$0xff]
        %v1270 = vld [vmem:[%s211 + $0x1ea0] sm:$0xff]
        %v1271 = vld [vmem:[%s211 + $0x1ea8] sm:$0xff]
        %v1272 = vld [vmem:[%s211 + $0x1eb0] sm:$0xff]
        %v1273 = vld [vmem:[%s211 + $0x1eb8] sm:$0xff]
        %v1274 = vld [vmem:[%s211 + $0x1ec0] sm:$0xff]
        %v1275 = vld [vmem:[%s211 + $0x1ec8] sm:$0xff]
        %v1276 = vld [vmem:[%s211 + $0x1ed0] sm:$0xff]
        %v1277 = vld [vmem:[%s211 + $0x1ed8] sm:$0xff]
        %v1278 = vld [vmem:[%s211 + $0x1ee0] sm:$0xff]
        %v1279 = vld [vmem:[%s211 + $0x1ee8] sm:$0xff]
        %v1280 = vld [vmem:[%s211 + $0x1ef0] sm:$0xff]
        %v1281 = vld [vmem:[%s211 + $0x1ef8] sm:$0xff]
        %v1282 = vld [vmem:[%s211 + $0x1f00] sm:$0xff]
        %v1283 = vld [vmem:[%s211 + $0x1f08] sm:$0xff]
        %v1284 = vld [vmem:[%s211 + $0x1f10] sm:$0xff]
        %v1285 = vld [vmem:[%s211 + $0x1f18] sm:$0xff]
        %v1286 = vld [vmem:[%s211 + $0x1f20] sm:$0xff]
        %v1287 = vld [vmem:[%s211 + $0x1f28] sm:$0xff]
        %v1288 = vld [vmem:[%s211 + $0x1f30] sm:$0xff]
        %v1289 = vld [vmem:[%s211 + $0x1f38] sm:$0xff]
        %v1290 = vld [vmem:[%s211 + $0x1f40] sm:$0xff]
        %v1291 = vld [vmem:[%s211 + $0x1f48] sm:$0xff]
        %v1292 = vld [vmem:[%s211 + $0x1f50] sm:$0xff]
        %v1293 = vld [vmem:[%s211 + $0x1f58] sm:$0xff]
        %v1294 = vld [vmem:[%s211 + $0x1f60] sm:$0xff]
        %v1295 = vld [vmem:[%s211 + $0x1f68] sm:$0xff]
        %v1296 = vld [vmem:[%s211 + $0x1f70] sm:$0xff]
        %v1297 = vld [vmem:[%s211 + $0x1f78] sm:$0xff]
        %v1298 = vld [vmem:[%s211 + $0x1f80] sm:$0xff]
        %v1299 = vld [vmem:[%s211 + $0x1f88] sm:$0xff]
        %v1300 = vld [vmem:[%s211 + $0x1f90] sm:$0xff]
        %v1301 = vld [vmem:[%s211 + $0x1f98] sm:$0xff]
        %v1302 = vld [vmem:[%s211 + $0x1fa0] sm:$0xff]
        %v1303 = vld [vmem:[%s211 + $0x1fa8] sm:$0xff]
        %v1304 = vld [vmem:[%s211 + $0x1fb0] sm:$0xff]
        %v1305 = vld [vmem:[%s211 + $0x1fb8] sm:$0xff]
        %v1306 = vld [vmem:[%s211 + $0x1fc0] sm:$0xff]
        %v1307 = vld [vmem:[%s211 + $0x1fc8] sm:$0xff]
        %v1308 = vld [vmem:[%s211 + $0x1fd0] sm:$0xff]
        %v1309 = vld [vmem:[%s211 + $0x1fd8] sm:$0xff]
        %v1310 = vld [vmem:[%s211 + $0x1fe0] sm:$0xff]
        %v1311 = vld [vmem:[%s211 + $0x1fe8] sm:$0xff]
        %v1312 = vld [vmem:[%s211 + $0x1ff0] sm:$0xff]
        %v1313 = vld [vmem:[%s211 + $0x1ff8] sm:$0xff]
        %v1314 = vld [vmem:[%s220] sm:$0xf]
        %v1316 = vlaneseq
        %v1317 = vshrl.u32 %v1316, 7
        %v1318 = vsub.s32 0, %v1317
        %v1319 = vrot.slane %v1314, %v1318
        %v1320 = vlaneseq
        %v1321 = vshrl.u32 %v1320, 7
        %v1322 = vsub.s32 1, %v1321
        %v1323 = vrot.slane %v1314, %v1322
        %v1324 = vlaneseq
        %v1325 = vshrl.u32 %v1324, 7
        %v1326 = vsub.s32 2, %v1325
        %v1327 = vrot.slane %v1314, %v1326
        %v1328 = vlaneseq
        %v1329 = vshrl.u32 %v1328, 7
        %v1330 = vsub.s32 3, %v1329
        %v1331 = vrot.slane %v1314, %v1330
        %1336 = vmatprep.subr.mxu0 %v351
        %1337 = vmatpush1.msra.mxu0 %v350
        %1338 = vmatprep.subr.mxu0 %v347
        %1339 = vmatpush1.msra.mxu0 %v346
        %1340 = vmatprep.subr.mxu0 %v343
        %1341 = vmatpush1.msra.mxu0 %v342
        %1342 = vmatprep.subr.mxu0 %v339
        %1343 = vmatpush1.msra.mxu0 %v338
        %1344 = vmatprep.subr.mxu0 %v335
        %1345 = vmatpush1.msra.mxu0 %v334
        %1346 = vmatprep.subr.mxu0 %v331
        %1347 = vmatpush1.msra.mxu0 %v330
        %1348 = vmatprep.subr.mxu0 %v327
        %1349 = vmatpush1.msra.mxu0 %v326
        %1350 = vmatprep.subr.mxu0 %v323
        %1351 = vmatpush1.msra.mxu0 %v322
        %1352 = vmatprep.subr.mxu0 %v319
        %1353 = vmatpush1.msra.mxu0 %v318
        %1354 = vmatprep.subr.mxu0 %v315
        %1355 = vmatpush1.msra.mxu0 %v314
        %1356 = vmatprep.subr.mxu0 %v311
        %1357 = vmatpush1.msra.mxu0 %v310
        %1358 = vmatprep.subr.mxu0 %v307
        %1359 = vmatpush1.msra.mxu0 %v306
        %1360 = vmatprep.subr.mxu0 %v303
        %1361 = vmatpush1.msra.mxu0 %v302
        %1362 = vmatprep.subr.mxu0 %v299
        %1363 = vmatpush1.msra.mxu0 %v298
        %1364 = vmatprep.subr.mxu0 %v295
        %1365 = vmatpush1.msra.mxu0 %v294
        %1366 = vmatprep.subr.mxu0 %v291
        %1367 = vmatpush1.msra.mxu0 %v290
        %1368 = vmatprep.subr.mxu0 %v415
        %1369 = vmatpush2.msra.mxu0 %v414
        %1370 = vmatprep.subr.mxu0 %v411
        %1371 = vmatpush2.msra.mxu0 %v410
        %1372 = vmatprep.subr.mxu0 %v407
        %1373 = vmatpush2.msra.mxu0 %v406
        %1374 = vmatprep.subr.mxu0 %v403
        %1375 = vmatpush2.msra.mxu0 %v402
        %1376 = vmatprep.subr.mxu0 %v399
        %1377 = vmatpush2.msra.mxu0 %v398
        %1378 = vmatprep.subr.mxu0 %v395
        %1379 = vmatpush2.msra.mxu0 %v394
        %1380 = vmatprep.subr.mxu0 %v391
        %1381 = vmatpush2.msra.mxu0 %v390
        %1382 = vmatprep.subr.mxu0 %v387
        %1383 = vmatpush2.msra.mxu0 %v386
        %1384 = vmatprep.subr.mxu0 %v383
        %1385 = vmatpush2.msra.mxu0 %v382
        %1386 = vmatprep.subr.mxu0 %v379
        %1387 = vmatpush2.msra.mxu0 %v378
        %1388 = vmatprep.subr.mxu0 %v375
        %1389 = vmatpush2.msra.mxu0 %v374
        %1390 = vmatprep.subr.mxu0 %v371
        %1391 = vmatpush2.msra.mxu0 %v370
        %1392 = vmatprep.subr.mxu0 %v367
        %1393 = vmatpush2.msra.mxu0 %v366
        %1394 = vmatprep.subr.mxu0 %v363
        %1395 = vmatpush2.msra.mxu0 %v362
        %1396 = vmatprep.subr.mxu0 %v359
        %1397 = vmatpush2.msra.mxu0 %v358
        %1398 = vmatprep.subr.mxu0 %v355
        %1399 = vmatpush2.msra.mxu0 %v354
        %1400 = vmatprep.mubr.f32.mxu0 %v275
        %1401 = vmatmul.mubr.f32.gmra.mxu0 %v274
        %v1402 = vpop.f32.mrf.mxu0
        %v1403 = vadd.f32 %v1319, %v1402
        %v1404 = vpop.f32.mrf.mxu0
        %v1405 = vadd.f32 %v1323, %v1404
        %1406 = vdwg.mxu0
        %1407 = vmatprep.subr.mxu0 %v479
        %1408 = vmatpush1.msra.mxu0 %v478
        %1409 = vmatprep.subr.mxu0 %v475
        %1410 = vmatpush1.msra.mxu0 %v474
        %1411 = vmatprep.subr.mxu0 %v471
        %1412 = vmatpush1.msra.mxu0 %v470
        %1413 = vmatprep.subr.mxu0 %v467
        %1414 = vmatpush1.msra.mxu0 %v466
        %1415 = vmatprep.subr.mxu0 %v463
        %1416 = vmatpush1.msra.mxu0 %v462
        %1417 = vmatprep.subr.mxu0 %v459
        %1418 = vmatpush1.msra.mxu0 %v458
        %1419 = vmatprep.subr.mxu0 %v455
        %1420 = vmatpush1.msra.mxu0 %v454
        %1421 = vmatprep.subr.mxu0 %v451
        %1422 = vmatpush1.msra.mxu0 %v450
        %1423 = vmatprep.subr.mxu0 %v447
        %1424 = vmatpush1.msra.mxu0 %v446
        %1425 = vmatprep.subr.mxu0 %v443
        %1426 = vmatpush1.msra.mxu0 %v442
        %1427 = vmatprep.subr.mxu0 %v439
        %1428 = vmatpush1.msra.mxu0 %v438
        %1429 = vmatprep.subr.mxu0 %v435
        %1430 = vmatpush1.msra.mxu0 %v434
        %1431 = vmatprep.subr.mxu0 %v431
        %1432 = vmatpush1.msra.mxu0 %v430
        %1433 = vmatprep.subr.mxu0 %v427
        %1434 = vmatpush1.msra.mxu0 %v426
        %1435 = vmatprep.subr.mxu0 %v423
        %1436 = vmatpush1.msra.mxu0 %v422
        %1437 = vmatprep.subr.mxu0 %v419
        %1438 = vmatpush1.msra.mxu0 %v418
        %1439 = vmatprep.subr.mxu0 %v543
        %1440 = vmatpush2.msra.mxu0 %v542
        %1441 = vmatprep.subr.mxu0 %v539
        %1442 = vmatpush2.msra.mxu0 %v538
        %1443 = vmatprep.subr.mxu0 %v535
        %1444 = vmatpush2.msra.mxu0 %v534
        %1445 = vmatprep.subr.mxu0 %v531
        %1446 = vmatpush2.msra.mxu0 %v530
        %1447 = vmatprep.subr.mxu0 %v527
        %1448 = vmatpush2.msra.mxu0 %v526
        %1449 = vmatprep.subr.mxu0 %v523
        %1450 = vmatpush2.msra.mxu0 %v522
        %1451 = vmatprep.subr.mxu0 %v519
        %1452 = vmatpush2.msra.mxu0 %v518
        %1453 = vmatprep.subr.mxu0 %v515
        %1454 = vmatpush2.msra.mxu0 %v514
        %1455 = vmatprep.subr.mxu0 %v511
        %1456 = vmatpush2.msra.mxu0 %v510
        %1457 = vmatprep.subr.mxu0 %v507
        %1458 = vmatpush2.msra.mxu0 %v506
        %1459 = vmatprep.subr.mxu0 %v503
        %1460 = vmatpush2.msra.mxu0 %v502
        %1461 = vmatprep.subr.mxu0 %v499
        %1462 = vmatpush2.msra.mxu0 %v498
        %1463 = vmatprep.subr.mxu0 %v495
        %1464 = vmatpush2.msra.mxu0 %v494
        %1465 = vmatprep.subr.mxu0 %v491
        %1466 = vmatpush2.msra.mxu0 %v490
        %1467 = vmatprep.subr.mxu0 %v487
        %1468 = vmatpush2.msra.mxu0 %v486
        %1469 = vmatprep.subr.mxu0 %v483
        %1470 = vmatpush2.msra.mxu0 %v482
        %1471 = vmatprep.mubr.f32.mxu0 %v277
        %1472 = vmatmul.mubr.f32.gmra.mxu0 %v276
        %v1473 = vpop.f32.mrf.mxu0
        %v1474 = vadd.f32 %v1403, %v1473
        %v1475 = vpop.f32.mrf.mxu0
        %v1476 = vadd.f32 %v1405, %v1475
        %1477 = vdwg.mxu0
        %1478 = vmatprep.subr.mxu0 %v607
        %1479 = vmatpush1.msra.mxu0 %v606
        %1480 = vmatprep.subr.mxu0 %v603
        %1481 = vmatpush1.msra.mxu0 %v602
        %1482 = vmatprep.subr.mxu0 %v599
        %1483 = vmatpush1.msra.mxu0 %v598
        %1484 = vmatprep.subr.mxu0 %v595
        %1485 = vmatpush1.msra.mxu0 %v594
        %1486 = vmatprep.subr.mxu0 %v591
        %1487 = vmatpush1.msra.mxu0 %v590
        %1488 = vmatprep.subr.mxu0 %v587
        %1489 = vmatpush1.msra.mxu0 %v586
        %1490 = vmatprep.subr.mxu0 %v583
        %1491 = vmatpush1.msra.mxu0 %v582
        %1492 = vmatprep.subr.mxu0 %v579
        %1493 = vmatpush1.msra.mxu0 %v578
        %1494 = vmatprep.subr.mxu0 %v575
        %1495 = vmatpush1.msra.mxu0 %v574
        %1496 = vmatprep.subr.mxu0 %v571
        %1497 = vmatpush1.msra.mxu0 %v570
        %1498 = vmatprep.subr.mxu0 %v567
        %1499 = vmatpush1.msra.mxu0 %v566
        %1500 = vmatprep.subr.mxu0 %v563
        %1501 = vmatpush1.msra.mxu0 %v562
        %1502 = vmatprep.subr.mxu0 %v559
        %1503 = vmatpush1.msra.mxu0 %v558
        %1504 = vmatprep.subr.mxu0 %v555
        %1505 = vmatpush1.msra.mxu0 %v554
        %1506 = vmatprep.subr.mxu0 %v551
        %1507 = vmatpush1.msra.mxu0 %v550
        %1508 = vmatprep.subr.mxu0 %v547
        %1509 = vmatpush1.msra.mxu0 %v546
        %1510 = vmatprep.subr.mxu0 %v671
        %1511 = vmatpush2.msra.mxu0 %v670
        %1512 = vmatprep.subr.mxu0 %v667
        %1513 = vmatpush2.msra.mxu0 %v666
        %1514 = vmatprep.subr.mxu0 %v663
        %1515 = vmatpush2.msra.mxu0 %v662
        %1516 = vmatprep.subr.mxu0 %v659
        %1517 = vmatpush2.msra.mxu0 %v658
        %1518 = vmatprep.subr.mxu0 %v655
        %1519 = vmatpush2.msra.mxu0 %v654
        %1520 = vmatprep.subr.mxu0 %v651
        %1521 = vmatpush2.msra.mxu0 %v650
        %1522 = vmatprep.subr.mxu0 %v647
        %1523 = vmatpush2.msra.mxu0 %v646
        %1524 = vmatprep.subr.mxu0 %v643
        %1525 = vmatpush2.msra.mxu0 %v642
        %1526 = vmatprep.subr.mxu0 %v639
        %1527 = vmatpush2.msra.mxu0 %v638
        %1528 = vmatprep.subr.mxu0 %v635
        %1529 = vmatpush2.msra.mxu0 %v634
        %1530 = vmatprep.subr.mxu0 %v631
        %1531 = vmatpush2.msra.mxu0 %v630
        %1532 = vmatprep.subr.mxu0 %v627
        %1533 = vmatpush2.msra.mxu0 %v626
        %1534 = vmatprep.subr.mxu0 %v623
        %1535 = vmatpush2.msra.mxu0 %v622
        %1536 = vmatprep.subr.mxu0 %v619
        %1537 = vmatpush2.msra.mxu0 %v618
        %1538 = vmatprep.subr.mxu0 %v615
        %1539 = vmatpush2.msra.mxu0 %v614
        %1540 = vmatprep.subr.mxu0 %v611
        %1541 = vmatpush2.msra.mxu0 %v610
        %1542 = vmatprep.mubr.f32.mxu0 %v279
        %1543 = vmatmul.mubr.f32.gmra.mxu0 %v278
        %v1544 = vpop.f32.mrf.mxu0
        %v1545 = vadd.f32 %v1474, %v1544
        %v1546 = vpop.f32.mrf.mxu0
        %v1547 = vadd.f32 %v1476, %v1546
        %1548 = vdwg.mxu0
        %1549 = vmatprep.subr.mxu0 %v735
        %1550 = vmatpush1.msra.mxu0 %v734
        %1551 = vmatprep.subr.mxu0 %v731
        %1552 = vmatpush1.msra.mxu0 %v730
        %1553 = vmatprep.subr.mxu0 %v727
        %1554 = vmatpush1.msra.mxu0 %v726
        %1555 = vmatprep.subr.mxu0 %v723
        %1556 = vmatpush1.msra.mxu0 %v722
        %1557 = vmatprep.subr.mxu0 %v719
        %1558 = vmatpush1.msra.mxu0 %v718
        %1559 = vmatprep.subr.mxu0 %v715
        %1560 = vmatpush1.msra.mxu0 %v714
        %1561 = vmatprep.subr.mxu0 %v711
        %1562 = vmatpush1.msra.mxu0 %v710
        %1563 = vmatprep.subr.mxu0 %v707
        %1564 = vmatpush1.msra.mxu0 %v706
        %1565 = vmatprep.subr.mxu0 %v703
        %1566 = vmatpush1.msra.mxu0 %v702
        %1567 = vmatprep.subr.mxu0 %v699
        %1568 = vmatpush1.msra.mxu0 %v698
        %1569 = vmatprep.subr.mxu0 %v695
        %1570 = vmatpush1.msra.mxu0 %v694
        %1571 = vmatprep.subr.mxu0 %v691
        %1572 = vmatpush1.msra.mxu0 %v690
        %1573 = vmatprep.subr.mxu0 %v687
        %1574 = vmatpush1.msra.mxu0 %v686
        %1575 = vmatprep.subr.mxu0 %v683
        %1576 = vmatpush1.msra.mxu0 %v682
        %1577 = vmatprep.subr.mxu0 %v679
        %1578 = vmatpush1.msra.mxu0 %v678
        %1579 = vmatprep.subr.mxu0 %v675
        %1580 = vmatpush1.msra.mxu0 %v674
        %1581 = vmatprep.subr.mxu0 %v799
        %1582 = vmatpush2.msra.mxu0 %v798
        %1583 = vmatprep.subr.mxu0 %v795
        %1584 = vmatpush2.msra.mxu0 %v794
        %1585 = vmatprep.subr.mxu0 %v791
        %1586 = vmatpush2.msra.mxu0 %v790
        %1587 = vmatprep.subr.mxu0 %v787
        %1588 = vmatpush2.msra.mxu0 %v786
        %1589 = vmatprep.subr.mxu0 %v783
        %1590 = vmatpush2.msra.mxu0 %v782
        %1591 = vmatprep.subr.mxu0 %v779
        %1592 = vmatpush2.msra.mxu0 %v778
        %1593 = vmatprep.subr.mxu0 %v775
        %1594 = vmatpush2.msra.mxu0 %v774
        %1595 = vmatprep.subr.mxu0 %v771
        %1596 = vmatpush2.msra.mxu0 %v770
        %1597 = vmatprep.subr.mxu0 %v767
        %1598 = vmatpush2.msra.mxu0 %v766
        %1599 = vmatprep.subr.mxu0 %v763
        %1600 = vmatpush2.msra.mxu0 %v762
        %1601 = vmatprep.subr.mxu0 %v759
        %1602 = vmatpush2.msra.mxu0 %v758
        %1603 = vmatprep.subr.mxu0 %v755
        %1604 = vmatpush2.msra.mxu0 %v754
        %1605 = vmatprep.subr.mxu0 %v751
        %1606 = vmatpush2.msra.mxu0 %v750
        %1607 = vmatprep.subr.mxu0 %v747
        %1608 = vmatpush2.msra.mxu0 %v746
        %1609 = vmatprep.subr.mxu0 %v743
        %1610 = vmatpush2.msra.mxu0 %v742
        %1611 = vmatprep.subr.mxu0 %v739
        %1612 = vmatpush2.msra.mxu0 %v738
        %1613 = vmatprep.mubr.f32.mxu0 %v281
        %1614 = vmatmul.mubr.f32.gmra.mxu0 %v280
        %v1615 = vpop.f32.mrf.mxu0
        %v1616 = vadd.f32 %v1545, %v1615
        %v1617 = vpop.f32.mrf.mxu0
        %v1618 = vadd.f32 %v1547, %v1617
        %1619 = vdwg.mxu0
        %1620 = vmatprep.subr.mxu0 %v863
        %1621 = vmatpush1.msra.mxu0 %v862
        %1622 = vmatprep.subr.mxu0 %v859
        %1623 = vmatpush1.msra.mxu0 %v858
        %1624 = vmatprep.subr.mxu0 %v855
        %1625 = vmatpush1.msra.mxu0 %v854
        %1626 = vmatprep.subr.mxu0 %v851
        %1627 = vmatpush1.msra.mxu0 %v850
        %1628 = vmatprep.subr.mxu0 %v847
        %1629 = vmatpush1.msra.mxu0 %v846
        %1630 = vmatprep.subr.mxu0 %v843
        %1631 = vmatpush1.msra.mxu0 %v842
        %1632 = vmatprep.subr.mxu0 %v839
        %1633 = vmatpush1.msra.mxu0 %v838
        %1634 = vmatprep.subr.mxu0 %v835
        %1635 = vmatpush1.msra.mxu0 %v834
        %1636 = vmatprep.subr.mxu0 %v831
        %1637 = vmatpush1.msra.mxu0 %v830
        %1638 = vmatprep.subr.mxu0 %v827
        %1639 = vmatpush1.msra.mxu0 %v826
        %1640 = vmatprep.subr.mxu0 %v823
        %1641 = vmatpush1.msra.mxu0 %v822
        %1642 = vmatprep.subr.mxu0 %v819
        %1643 = vmatpush1.msra.mxu0 %v818
        %1644 = vmatprep.subr.mxu0 %v815
        %1645 = vmatpush1.msra.mxu0 %v814
        %1646 = vmatprep.subr.mxu0 %v811
        %1647 = vmatpush1.msra.mxu0 %v810
        %1648 = vmatprep.subr.mxu0 %v807
        %1649 = vmatpush1.msra.mxu0 %v806
        %1650 = vmatprep.subr.mxu0 %v803
        %1651 = vmatpush1.msra.mxu0 %v802
        %1652 = vmatprep.subr.mxu0 %v927
        %1653 = vmatpush2.msra.mxu0 %v926
        %1654 = vmatprep.subr.mxu0 %v923
        %1655 = vmatpush2.msra.mxu0 %v922
        %1656 = vmatprep.subr.mxu0 %v919
        %1657 = vmatpush2.msra.mxu0 %v918
        %1658 = vmatprep.subr.mxu0 %v915
        %1659 = vmatpush2.msra.mxu0 %v914
        %1660 = vmatprep.subr.mxu0 %v911
        %1661 = vmatpush2.msra.mxu0 %v910
        %1662 = vmatprep.subr.mxu0 %v907
        %1663 = vmatpush2.msra.mxu0 %v906
        %1664 = vmatprep.subr.mxu0 %v903
        %1665 = vmatpush2.msra.mxu0 %v902
        %1666 = vmatprep.subr.mxu0 %v899
        %1667 = vmatpush2.msra.mxu0 %v898
        %1668 = vmatprep.subr.mxu0 %v895
        %1669 = vmatpush2.msra.mxu0 %v894
        %1670 = vmatprep.subr.mxu0 %v891
        %1671 = vmatpush2.msra.mxu0 %v890
        %1672 = vmatprep.subr.mxu0 %v887
        %1673 = vmatpush2.msra.mxu0 %v886
        %1674 = vmatprep.subr.mxu0 %v883
        %1675 = vmatpush2.msra.mxu0 %v882
        %1676 = vmatprep.subr.mxu0 %v879
        %1677 = vmatpush2.msra.mxu0 %v878
        %1678 = vmatprep.subr.mxu0 %v875
        %1679 = vmatpush2.msra.mxu0 %v874
        %1680 = vmatprep.subr.mxu0 %v871
        %1681 = vmatpush2.msra.mxu0 %v870
        %1682 = vmatprep.subr.mxu0 %v867
        %1683 = vmatpush2.msra.mxu0 %v866
        %1684 = vmatprep.mubr.f32.mxu0 %v283
        %1685 = vmatmul.mubr.f32.gmra.mxu0 %v282
        %v1686 = vpop.f32.mrf.mxu0
        %v1687 = vadd.f32 %v1616, %v1686
        %v1688 = vpop.f32.mrf.mxu0
        %v1689 = vadd.f32 %v1618, %v1688
        %1690 = vdwg.mxu0
        %1691 = vmatprep.subr.mxu0 %v991
        %1692 = vmatpush1.msra.mxu0 %v990
        %1693 = vmatprep.subr.mxu0 %v987
        %1694 = vmatpush1.msra.mxu0 %v986
        %1695 = vmatprep.subr.mxu0 %v983
        %1696 = vmatpush1.msra.mxu0 %v982
        %1697 = vmatprep.subr.mxu0 %v979
        %1698 = vmatpush1.msra.mxu0 %v978
        %1699 = vmatprep.subr.mxu0 %v975
        %1700 = vmatpush1.msra.mxu0 %v974
        %1701 = vmatprep.subr.mxu0 %v971
        %1702 = vmatpush1.msra.mxu0 %v970
        %1703 = vmatprep.subr.mxu0 %v967
        %1704 = vmatpush1.msra.mxu0 %v966
        %1705 = vmatprep.subr.mxu0 %v963
        %1706 = vmatpush1.msra.mxu0 %v962
        %1707 = vmatprep.subr.mxu0 %v959
        %1708 = vmatpush1.msra.mxu0 %v958
        %1709 = vmatprep.subr.mxu0 %v955
        %1710 = vmatpush1.msra.mxu0 %v954
        %1711 = vmatprep.subr.mxu0 %v951
        %1712 = vmatpush1.msra.mxu0 %v950
        %1713 = vmatprep.subr.mxu0 %v947
        %1714 = vmatpush1.msra.mxu0 %v946
        %1715 = vmatprep.subr.mxu0 %v943
        %1716 = vmatpush1.msra.mxu0 %v942
        %1717 = vmatprep.subr.mxu0 %v939
        %1718 = vmatpush1.msra.mxu0 %v938
        %1719 = vmatprep.subr.mxu0 %v935
        %1720 = vmatpush1.msra.mxu0 %v934
        %1721 = vmatprep.subr.mxu0 %v931
        %1722 = vmatpush1.msra.mxu0 %v930
        %1723 = vmatprep.subr.mxu0 %v1055
        %1724 = vmatpush2.msra.mxu0 %v1054
        %1725 = vmatprep.subr.mxu0 %v1051
        %1726 = vmatpush2.msra.mxu0 %v1050
        %1727 = vmatprep.subr.mxu0 %v1047
        %1728 = vmatpush2.msra.mxu0 %v1046
        %1729 = vmatprep.subr.mxu0 %v1043
        %1730 = vmatpush2.msra.mxu0 %v1042
        %1731 = vmatprep.subr.mxu0 %v1039
        %1732 = vmatpush2.msra.mxu0 %v1038
        %1733 = vmatprep.subr.mxu0 %v1035
        %1734 = vmatpush2.msra.mxu0 %v1034
        %1735 = vmatprep.subr.mxu0 %v1031
        %1736 = vmatpush2.msra.mxu0 %v1030
        %1737 = vmatprep.subr.mxu0 %v1027
        %1738 = vmatpush2.msra.mxu0 %v1026
        %1739 = vmatprep.subr.mxu0 %v1023
        %1740 = vmatpush2.msra.mxu0 %v1022
        %1741 = vmatprep.subr.mxu0 %v1019
        %1742 = vmatpush2.msra.mxu0 %v1018
        %1743 = vmatprep.subr.mxu0 %v1015
        %1744 = vmatpush2.msra.mxu0 %v1014
        %1745 = vmatprep.subr.mxu0 %v1011
        %1746 = vmatpush2.msra.mxu0 %v1010
        %1747 = vmatprep.subr.mxu0 %v1007
        %1748 = vmatpush2.msra.mxu0 %v1006
        %1749 = vmatprep.subr.mxu0 %v1003
        %1750 = vmatpush2.msra.mxu0 %v1002
        %1751 = vmatprep.subr.mxu0 %v999
        %1752 = vmatpush2.msra.mxu0 %v998
        %1753 = vmatprep.subr.mxu0 %v995
        %1754 = vmatpush2.msra.mxu0 %v994
        %1755 = vmatprep.mubr.f32.mxu0 %v285
        %1756 = vmatmul.mubr.f32.gmra.mxu0 %v284
        %v1757 = vpop.f32.mrf.mxu0
        %v1758 = vadd.f32 %v1687, %v1757
        %v1759 = vpop.f32.mrf.mxu0
        %v1760 = vadd.f32 %v1689, %v1759
        %1761 = vdwg.mxu0
        %1762 = vmatprep.subr.mxu0 %v1119
        %1763 = vmatpush1.msra.mxu0 %v1118
        %1764 = vmatprep.subr.mxu0 %v1115
        %1765 = vmatpush1.msra.mxu0 %v1114
        %1766 = vmatprep.subr.mxu0 %v1111
        %1767 = vmatpush1.msra.mxu0 %v1110
        %1768 = vmatprep.subr.mxu0 %v1107
        %1769 = vmatpush1.msra.mxu0 %v1106
        %1770 = vmatprep.subr.mxu0 %v1103
        %1771 = vmatpush1.msra.mxu0 %v1102
        %1772 = vmatprep.subr.mxu0 %v1099
        %1773 = vmatpush1.msra.mxu0 %v1098
        %1774 = vmatprep.subr.mxu0 %v1095
        %1775 = vmatpush1.msra.mxu0 %v1094
        %1776 = vmatprep.subr.mxu0 %v1091
        %1777 = vmatpush1.msra.mxu0 %v1090
        %1778 = vmatprep.subr.mxu0 %v1087
        %1779 = vmatpush1.msra.mxu0 %v1086
        %1780 = vmatprep.subr.mxu0 %v1083
        %1781 = vmatpush1.msra.mxu0 %v1082
        %1782 = vmatprep.subr.mxu0 %v1079
        %1783 = vmatpush1.msra.mxu0 %v1078
        %1784 = vmatprep.subr.mxu0 %v1075
        %1785 = vmatpush1.msra.mxu0 %v1074
        %1786 = vmatprep.subr.mxu0 %v1071
        %1787 = vmatpush1.msra.mxu0 %v1070
        %1788 = vmatprep.subr.mxu0 %v1067
        %1789 = vmatpush1.msra.mxu0 %v1066
        %1790 = vmatprep.subr.mxu0 %v1063
        %1791 = vmatpush1.msra.mxu0 %v1062
        %1792 = vmatprep.subr.mxu0 %v1059
        %1793 = vmatpush1.msra.mxu0 %v1058
        %1794 = vmatprep.subr.mxu0 %v1183
        %1795 = vmatpush2.msra.mxu0 %v1182
        %1796 = vmatprep.subr.mxu0 %v1179
        %1797 = vmatpush2.msra.mxu0 %v1178
        %1798 = vmatprep.subr.mxu0 %v1175
        %1799 = vmatpush2.msra.mxu0 %v1174
        %1800 = vmatprep.subr.mxu0 %v1171
        %1801 = vmatpush2.msra.mxu0 %v1170
        %1802 = vmatprep.subr.mxu0 %v1167
        %1803 = vmatpush2.msra.mxu0 %v1166
        %1804 = vmatprep.subr.mxu0 %v1163
        %1805 = vmatpush2.msra.mxu0 %v1162
        %1806 = vmatprep.subr.mxu0 %v1159
        %1807 = vmatpush2.msra.mxu0 %v1158
        %1808 = vmatprep.subr.mxu0 %v1155
        %1809 = vmatpush2.msra.mxu0 %v1154
        %1810 = vmatprep.subr.mxu0 %v1151
        %1811 = vmatpush2.msra.mxu0 %v1150
        %1812 = vmatprep.subr.mxu0 %v1147
        %1813 = vmatpush2.msra.mxu0 %v1146
        %1814 = vmatprep.subr.mxu0 %v1143
        %1815 = vmatpush2.msra.mxu0 %v1142
        %1816 = vmatprep.subr.mxu0 %v1139
        %1817 = vmatpush2.msra.mxu0 %v1138
        %1818 = vmatprep.subr.mxu0 %v1135
        %1819 = vmatpush2.msra.mxu0 %v1134
        %1820 = vmatprep.subr.mxu0 %v1131
        %1821 = vmatpush2.msra.mxu0 %v1130
        %1822 = vmatprep.subr.mxu0 %v1127
        %1823 = vmatpush2.msra.mxu0 %v1126
        %1824 = vmatprep.subr.mxu0 %v1123
        %1825 = vmatpush2.msra.mxu0 %v1122
        %1826 = vmatprep.mubr.f32.mxu0 %v287
        %1827 = vmatmul.mubr.f32.gmra.mxu0 %v286
        %v1828 = vpop.f32.mrf.mxu0
        %v1829 = vadd.f32 %v1758, %v1828
        %v1830 = vpop.f32.mrf.mxu0
        %v1831 = vadd.f32 %v1760, %v1830
        %1832 = vdwg.mxu0
        %1833 = vmatprep.subr.mxu0 %v1247
        %1834 = vmatpush1.msra.mxu0 %v1246
        %1835 = vmatprep.subr.mxu0 %v1243
        %1836 = vmatpush1.msra.mxu0 %v1242
        %1837 = vmatprep.subr.mxu0 %v1239
        %1838 = vmatpush1.msra.mxu0 %v1238
        %1839 = vmatprep.subr.mxu0 %v1235
        %1840 = vmatpush1.msra.mxu0 %v1234
        %1841 = vmatprep.subr.mxu0 %v1231
        %1842 = vmatpush1.msra.mxu0 %v1230
        %1843 = vmatprep.subr.mxu0 %v1227
        %1844 = vmatpush1.msra.mxu0 %v1226
        %1845 = vmatprep.subr.mxu0 %v1223
        %1846 = vmatpush1.msra.mxu0 %v1222
        %1847 = vmatprep.subr.mxu0 %v1219
        %1848 = vmatpush1.msra.mxu0 %v1218
        %1849 = vmatprep.subr.mxu0 %v1215
        %1850 = vmatpush1.msra.mxu0 %v1214
        %1851 = vmatprep.subr.mxu0 %v1211
        %1852 = vmatpush1.msra.mxu0 %v1210
        %1853 = vmatprep.subr.mxu0 %v1207
        %1854 = vmatpush1.msra.mxu0 %v1206
        %1855 = vmatprep.subr.mxu0 %v1203
        %1856 = vmatpush1.msra.mxu0 %v1202
        %1857 = vmatprep.subr.mxu0 %v1199
        %1858 = vmatpush1.msra.mxu0 %v1198
        %1859 = vmatprep.subr.mxu0 %v1195
        %1860 = vmatpush1.msra.mxu0 %v1194
        %1861 = vmatprep.subr.mxu0 %v1191
        %1862 = vmatpush1.msra.mxu0 %v1190
        %1863 = vmatprep.subr.mxu0 %v1187
        %1864 = vmatpush1.msra.mxu0 %v1186
        %1865 = vmatprep.subr.mxu0 %v1311
        %1866 = vmatpush2.msra.mxu0 %v1310
        %1867 = vmatprep.subr.mxu0 %v1307
        %1868 = vmatpush2.msra.mxu0 %v1306
        %1869 = vmatprep.subr.mxu0 %v1303
        %1870 = vmatpush2.msra.mxu0 %v1302
        %1871 = vmatprep.subr.mxu0 %v1299
        %1872 = vmatpush2.msra.mxu0 %v1298
        %1873 = vmatprep.subr.mxu0 %v1295
        %1874 = vmatpush2.msra.mxu0 %v1294
        %1875 = vmatprep.subr.mxu0 %v1291
        %1876 = vmatpush2.msra.mxu0 %v1290
        %1877 = vmatprep.subr.mxu0 %v1287
        %1878 = vmatpush2.msra.mxu0 %v1286
        %1879 = vmatprep.subr.mxu0 %v1283
        %1880 = vmatpush2.msra.mxu0 %v1282
        %1881 = vmatprep.subr.mxu0 %v1279
        %1882 = vmatpush2.msra.mxu0 %v1278
        %1883 = vmatprep.subr.mxu0 %v1275
        %1884 = vmatpush2.msra.mxu0 %v1274
        %1885 = vmatprep.subr.mxu0 %v1271
        %1886 = vmatpush2.msra.mxu0 %v1270
        %1887 = vmatprep.subr.mxu0 %v1267
        %1888 = vmatpush2.msra.mxu0 %v1266
        %1889 = vmatprep.subr.mxu0 %v1263
        %1890 = vmatpush2.msra.mxu0 %v1262
        %1891 = vmatprep.subr.mxu0 %v1259
        %1892 = vmatpush2.msra.mxu0 %v1258
        %1893 = vmatprep.subr.mxu0 %v1255
        %1894 = vmatpush2.msra.mxu0 %v1254
        %1895 = vmatprep.subr.mxu0 %v1251
        %1896 = vmatpush2.msra.mxu0 %v1250
        %1897 = vmatprep.mubr.f32.mxu0 %v289
        %1898 = vmatmul.mubr.f32.gmra.mxu0 %v288
        %v1899 = vpop.f32.mrf.mxu0
        %v1900 = vadd.f32 %v1829, %v1899
        %v1901 = vpop.f32.mrf.mxu0
        %v1902 = vadd.f32 %v1831, %v1901
        %1903 = vdwg.mxu0
        %1904 = vmatprep.subr.mxu0 %v353
        %1905 = vmatpush1.msra.mxu0 %v352
        %1906 = vmatprep.subr.mxu0 %v349
        %1907 = vmatpush1.msra.mxu0 %v348
        %1908 = vmatprep.subr.mxu0 %v345
        %1909 = vmatpush1.msra.mxu0 %v344
        %1910 = vmatprep.subr.mxu0 %v341
        %1911 = vmatpush1.msra.mxu0 %v340
        %1912 = vmatprep.subr.mxu0 %v337
        %1913 = vmatpush1.msra.mxu0 %v336
        %1914 = vmatprep.subr.mxu0 %v333
        %1915 = vmatpush1.msra.mxu0 %v332
        %1916 = vmatprep.subr.mxu0 %v329
        %1917 = vmatpush1.msra.mxu0 %v328
        %1918 = vmatprep.subr.mxu0 %v325
        %1919 = vmatpush1.msra.mxu0 %v324
        %1920 = vmatprep.subr.mxu0 %v321
        %1921 = vmatpush1.msra.mxu0 %v320
        %1922 = vmatprep.subr.mxu0 %v317
        %1923 = vmatpush1.msra.mxu0 %v316
        %1924 = vmatprep.subr.mxu0 %v313
        %1925 = vmatpush1.msra.mxu0 %v312
        %1926 = vmatprep.subr.mxu0 %v309
        %1927 = vmatpush1.msra.mxu0 %v308
        %1928 = vmatprep.subr.mxu0 %v305
        %1929 = vmatpush1.msra.mxu0 %v304
        %1930 = vmatprep.subr.mxu0 %v301
        %1931 = vmatpush1.msra.mxu0 %v300
        %1932 = vmatprep.subr.mxu0 %v297
        %1933 = vmatpush1.msra.mxu0 %v296
        %1934 = vmatprep.subr.mxu0 %v293
        %1935 = vmatpush1.msra.mxu0 %v292
        %1936 = vmatprep.subr.mxu0 %v417
        %1937 = vmatpush2.msra.mxu0 %v416
        %1938 = vmatprep.subr.mxu0 %v413
        %1939 = vmatpush2.msra.mxu0 %v412
        %1940 = vmatprep.subr.mxu0 %v409
        %1941 = vmatpush2.msra.mxu0 %v408
        %1942 = vmatprep.subr.mxu0 %v405
        %1943 = vmatpush2.msra.mxu0 %v404
        %1944 = vmatprep.subr.mxu0 %v401
        %1945 = vmatpush2.msra.mxu0 %v400
        %1946 = vmatprep.subr.mxu0 %v397
        %1947 = vmatpush2.msra.mxu0 %v396
        %1948 = vmatprep.subr.mxu0 %v393
        %1949 = vmatpush2.msra.mxu0 %v392
        %1950 = vmatprep.subr.mxu0 %v389
        %1951 = vmatpush2.msra.mxu0 %v388
        %1952 = vmatprep.subr.mxu0 %v385
        %1953 = vmatpush2.msra.mxu0 %v384
        %1954 = vmatprep.subr.mxu0 %v381
        %1955 = vmatpush2.msra.mxu0 %v380
        %1956 = vmatprep.subr.mxu0 %v377
        %1957 = vmatpush2.msra.mxu0 %v376
        %1958 = vmatprep.subr.mxu0 %v373
        %1959 = vmatpush2.msra.mxu0 %v372
        %1960 = vmatprep.subr.mxu0 %v369
        %1961 = vmatpush2.msra.mxu0 %v368
        %1962 = vmatprep.subr.mxu0 %v365
        %1963 = vmatpush2.msra.mxu0 %v364
        %1964 = vmatprep.subr.mxu0 %v361
        %1965 = vmatpush2.msra.mxu0 %v360
        %1966 = vmatprep.subr.mxu0 %v357
        %1967 = vmatpush2.msra.mxu0 %v356
        %1968 = vmatprep.mubr.f32.mxu0 %v275
        %1969 = vmatmul.mubr.f32.gmra.mxu0 %v274
        %v1970 = vpop.f32.mrf.mxu0
        %v1971 = vadd.f32 %v1327, %v1970
        %v1972 = vpop.f32.mrf.mxu0
        %v1973 = vadd.f32 %v1331, %v1972
        %1974 = vdwg.mxu0
        %1975 = vmatprep.subr.mxu0 %v481
        %1976 = vmatpush1.msra.mxu0 %v480
        %1977 = vmatprep.subr.mxu0 %v477
        %1978 = vmatpush1.msra.mxu0 %v476
        %1979 = vmatprep.subr.mxu0 %v473
        %1980 = vmatpush1.msra.mxu0 %v472
        %1981 = vmatprep.subr.mxu0 %v469
        %1982 = vmatpush1.msra.mxu0 %v468
        %1983 = vmatprep.subr.mxu0 %v465
        %1984 = vmatpush1.msra.mxu0 %v464
        %1985 = vmatprep.subr.mxu0 %v461
        %1986 = vmatpush1.msra.mxu0 %v460
        %1987 = vmatprep.subr.mxu0 %v457
        %1988 = vmatpush1.msra.mxu0 %v456
        %1989 = vmatprep.subr.mxu0 %v453
        %1990 = vmatpush1.msra.mxu0 %v452
        %1991 = vmatprep.subr.mxu0 %v449
        %1992 = vmatpush1.msra.mxu0 %v448
        %1993 = vmatprep.subr.mxu0 %v445
        %1994 = vmatpush1.msra.mxu0 %v444
        %1995 = vmatprep.subr.mxu0 %v441
        %1996 = vmatpush1.msra.mxu0 %v440
        %1997 = vmatprep.subr.mxu0 %v437
        %1998 = vmatpush1.msra.mxu0 %v436
        %1999 = vmatprep.subr.mxu0 %v433
        %2000 = vmatpush1.msra.mxu0 %v432
        %2001 = vmatprep.subr.mxu0 %v429
        %2002 = vmatpush1.msra.mxu0 %v428
        %2003 = vmatprep.subr.mxu0 %v425
        %2004 = vmatpush1.msra.mxu0 %v424
        %2005 = vmatprep.subr.mxu0 %v421
        %2006 = vmatpush1.msra.mxu0 %v420
        %2007 = vmatprep.subr.mxu0 %v545
        %2008 = vmatpush2.msra.mxu0 %v544
        %2009 = vmatprep.subr.mxu0 %v541
        %2010 = vmatpush2.msra.mxu0 %v540
        %2011 = vmatprep.subr.mxu0 %v537
        %2012 = vmatpush2.msra.mxu0 %v536
        %2013 = vmatprep.subr.mxu0 %v533
        %2014 = vmatpush2.msra.mxu0 %v532
        %2015 = vmatprep.subr.mxu0 %v529
        %2016 = vmatpush2.msra.mxu0 %v528
        %2017 = vmatprep.subr.mxu0 %v525
        %2018 = vmatpush2.msra.mxu0 %v524
        %2019 = vmatprep.subr.mxu0 %v521
        %2020 = vmatpush2.msra.mxu0 %v520
        %2021 = vmatprep.subr.mxu0 %v517
        %2022 = vmatpush2.msra.mxu0 %v516
        %2023 = vmatprep.subr.mxu0 %v513
        %2024 = vmatpush2.msra.mxu0 %v512
        %2025 = vmatprep.subr.mxu0 %v509
        %2026 = vmatpush2.msra.mxu0 %v508
        %2027 = vmatprep.subr.mxu0 %v505
        %2028 = vmatpush2.msra.mxu0 %v504
        %2029 = vmatprep.subr.mxu0 %v501
        %2030 = vmatpush2.msra.mxu0 %v500
        %2031 = vmatprep.subr.mxu0 %v497
        %2032 = vmatpush2.msra.mxu0 %v496
        %2033 = vmatprep.subr.mxu0 %v493
        %2034 = vmatpush2.msra.mxu0 %v492
        %2035 = vmatprep.subr.mxu0 %v489
        %2036 = vmatpush2.msra.mxu0 %v488
        %2037 = vmatprep.subr.mxu0 %v485
        %2038 = vmatpush2.msra.mxu0 %v484
        %2039 = vmatprep.mubr.f32.mxu0 %v277
        %2040 = vmatmul.mubr.f32.gmra.mxu0 %v276
        %v2041 = vpop.f32.mrf.mxu0
        %v2042 = vadd.f32 %v1971, %v2041
        %v2043 = vpop.f32.mrf.mxu0
        %v2044 = vadd.f32 %v1973, %v2043
        %2045 = vdwg.mxu0
        %2046 = vmatprep.subr.mxu0 %v609
        %2047 = vmatpush1.msra.mxu0 %v608
        %2048 = vmatprep.subr.mxu0 %v605
        %2049 = vmatpush1.msra.mxu0 %v604
        %2050 = vmatprep.subr.mxu0 %v601
        %2051 = vmatpush1.msra.mxu0 %v600
        %2052 = vmatprep.subr.mxu0 %v597
        %2053 = vmatpush1.msra.mxu0 %v596
        %2054 = vmatprep.subr.mxu0 %v593
        %2055 = vmatpush1.msra.mxu0 %v592
        %2056 = vmatprep.subr.mxu0 %v589
        %2057 = vmatpush1.msra.mxu0 %v588
        %2058 = vmatprep.subr.mxu0 %v585
        %2059 = vmatpush1.msra.mxu0 %v584
        %2060 = vmatprep.subr.mxu0 %v581
        %2061 = vmatpush1.msra.mxu0 %v580
        %2062 = vmatprep.subr.mxu0 %v577
        %2063 = vmatpush1.msra.mxu0 %v576
        %2064 = vmatprep.subr.mxu0 %v573
        %2065 = vmatpush1.msra.mxu0 %v572
        %2066 = vmatprep.subr.mxu0 %v569
        %2067 = vmatpush1.msra.mxu0 %v568
        %2068 = vmatprep.subr.mxu0 %v565
        %2069 = vmatpush1.msra.mxu0 %v564
        %2070 = vmatprep.subr.mxu0 %v561
        %2071 = vmatpush1.msra.mxu0 %v560
        %2072 = vmatprep.subr.mxu0 %v557
        %2073 = vmatpush1.msra.mxu0 %v556
        %2074 = vmatprep.subr.mxu0 %v553
        %2075 = vmatpush1.msra.mxu0 %v552
        %2076 = vmatprep.subr.mxu0 %v549
        %2077 = vmatpush1.msra.mxu0 %v548
        %2078 = vmatprep.subr.mxu0 %v673
        %2079 = vmatpush2.msra.mxu0 %v672
        %2080 = vmatprep.subr.mxu0 %v669
        %2081 = vmatpush2.msra.mxu0 %v668
        %2082 = vmatprep.subr.mxu0 %v665
        %2083 = vmatpush2.msra.mxu0 %v664
        %2084 = vmatprep.subr.mxu0 %v661
        %2085 = vmatpush2.msra.mxu0 %v660
        %2086 = vmatprep.subr.mxu0 %v657
        %2087 = vmatpush2.msra.mxu0 %v656
        %2088 = vmatprep.subr.mxu0 %v653
        %2089 = vmatpush2.msra.mxu0 %v652
        %2090 = vmatprep.subr.mxu0 %v649
        %2091 = vmatpush2.msra.mxu0 %v648
        %2092 = vmatprep.subr.mxu0 %v645
        %2093 = vmatpush2.msra.mxu0 %v644
        %2094 = vmatprep.subr.mxu0 %v641
        %2095 = vmatpush2.msra.mxu0 %v640
        %2096 = vmatprep.subr.mxu0 %v637
        %2097 = vmatpush2.msra.mxu0 %v636
        %2098 = vmatprep.subr.mxu0 %v633
        %2099 = vmatpush2.msra.mxu0 %v632
        %2100 = vmatprep.subr.mxu0 %v629
        %2101 = vmatpush2.msra.mxu0 %v628
        %2102 = vmatprep.subr.mxu0 %v625
        %2103 = vmatpush2.msra.mxu0 %v624
        %2104 = vmatprep.subr.mxu0 %v621
        %2105 = vmatpush2.msra.mxu0 %v620
        %2106 = vmatprep.subr.mxu0 %v617
        %2107 = vmatpush2.msra.mxu0 %v616
        %2108 = vmatprep.subr.mxu0 %v613
        %2109 = vmatpush2.msra.mxu0 %v612
        %2110 = vmatprep.mubr.f32.mxu0 %v279
        %2111 = vmatmul.mubr.f32.gmra.mxu0 %v278
        %v2112 = vpop.f32.mrf.mxu0
        %v2113 = vadd.f32 %v2042, %v2112
        %v2114 = vpop.f32.mrf.mxu0
        %v2115 = vadd.f32 %v2044, %v2114
        %2116 = vdwg.mxu0
        %2117 = vmatprep.subr.mxu0 %v737
        %2118 = vmatpush1.msra.mxu0 %v736
        %2119 = vmatprep.subr.mxu0 %v733
        %2120 = vmatpush1.msra.mxu0 %v732
        %2121 = vmatprep.subr.mxu0 %v729
        %2122 = vmatpush1.msra.mxu0 %v728
        %2123 = vmatprep.subr.mxu0 %v725
        %2124 = vmatpush1.msra.mxu0 %v724
        %2125 = vmatprep.subr.mxu0 %v721
        %2126 = vmatpush1.msra.mxu0 %v720
        %2127 = vmatprep.subr.mxu0 %v717
        %2128 = vmatpush1.msra.mxu0 %v716
        %2129 = vmatprep.subr.mxu0 %v713
        %2130 = vmatpush1.msra.mxu0 %v712
        %2131 = vmatprep.subr.mxu0 %v709
        %2132 = vmatpush1.msra.mxu0 %v708
        %2133 = vmatprep.subr.mxu0 %v705
        %2134 = vmatpush1.msra.mxu0 %v704
        %2135 = vmatprep.subr.mxu0 %v701
        %2136 = vmatpush1.msra.mxu0 %v700
        %2137 = vmatprep.subr.mxu0 %v697
        %2138 = vmatpush1.msra.mxu0 %v696
        %2139 = vmatprep.subr.mxu0 %v693
        %2140 = vmatpush1.msra.mxu0 %v692
        %2141 = vmatprep.subr.mxu0 %v689
        %2142 = vmatpush1.msra.mxu0 %v688
        %2143 = vmatprep.subr.mxu0 %v685
        %2144 = vmatpush1.msra.mxu0 %v684
        %2145 = vmatprep.subr.mxu0 %v681
        %2146 = vmatpush1.msra.mxu0 %v680
        %2147 = vmatprep.subr.mxu0 %v677
        %2148 = vmatpush1.msra.mxu0 %v676
        %2149 = vmatprep.subr.mxu0 %v801
        %2150 = vmatpush2.msra.mxu0 %v800
        %2151 = vmatprep.subr.mxu0 %v797
        %2152 = vmatpush2.msra.mxu0 %v796
        %2153 = vmatprep.subr.mxu0 %v793
        %2154 = vmatpush2.msra.mxu0 %v792
        %2155 = vmatprep.subr.mxu0 %v789
        %2156 = vmatpush2.msra.mxu0 %v788
        %2157 = vmatprep.subr.mxu0 %v785
        %2158 = vmatpush2.msra.mxu0 %v784
        %2159 = vmatprep.subr.mxu0 %v781
        %2160 = vmatpush2.msra.mxu0 %v780
        %2161 = vmatprep.subr.mxu0 %v777
        %2162 = vmatpush2.msra.mxu0 %v776
        %2163 = vmatprep.subr.mxu0 %v773
        %2164 = vmatpush2.msra.mxu0 %v772
        %2165 = vmatprep.subr.mxu0 %v769
        %2166 = vmatpush2.msra.mxu0 %v768
        %2167 = vmatprep.subr.mxu0 %v765
        %2168 = vmatpush2.msra.mxu0 %v764
        %2169 = vmatprep.subr.mxu0 %v761
        %2170 = vmatpush2.msra.mxu0 %v760
        %2171 = vmatprep.subr.mxu0 %v757
        %2172 = vmatpush2.msra.mxu0 %v756
        %2173 = vmatprep.subr.mxu0 %v753
        %2174 = vmatpush2.msra.mxu0 %v752
        %2175 = vmatprep.subr.mxu0 %v749
        %2176 = vmatpush2.msra.mxu0 %v748
        %2177 = vmatprep.subr.mxu0 %v745
        %2178 = vmatpush2.msra.mxu0 %v744
        %2179 = vmatprep.subr.mxu0 %v741
        %2180 = vmatpush2.msra.mxu0 %v740
        %2181 = vmatprep.mubr.f32.mxu0 %v281
        %2182 = vmatmul.mubr.f32.gmra.mxu0 %v280
        %v2183 = vpop.f32.mrf.mxu0
        %v2184 = vadd.f32 %v2113, %v2183
        %v2185 = vpop.f32.mrf.mxu0
        %v2186 = vadd.f32 %v2115, %v2185
        %2187 = vdwg.mxu0
        %2188 = vmatprep.subr.mxu0 %v865
        %2189 = vmatpush1.msra.mxu0 %v864
        %2190 = vmatprep.subr.mxu0 %v861
        %2191 = vmatpush1.msra.mxu0 %v860
        %2192 = vmatprep.subr.mxu0 %v857
        %2193 = vmatpush1.msra.mxu0 %v856
        %2194 = vmatprep.subr.mxu0 %v853
        %2195 = vmatpush1.msra.mxu0 %v852
        %2196 = vmatprep.subr.mxu0 %v849
        %2197 = vmatpush1.msra.mxu0 %v848
        %2198 = vmatprep.subr.mxu0 %v845
        %2199 = vmatpush1.msra.mxu0 %v844
        %2200 = vmatprep.subr.mxu0 %v841
        %2201 = vmatpush1.msra.mxu0 %v840
        %2202 = vmatprep.subr.mxu0 %v837
        %2203 = vmatpush1.msra.mxu0 %v836
        %2204 = vmatprep.subr.mxu0 %v833
        %2205 = vmatpush1.msra.mxu0 %v832
        %2206 = vmatprep.subr.mxu0 %v829
        %2207 = vmatpush1.msra.mxu0 %v828
        %2208 = vmatprep.subr.mxu0 %v825
        %2209 = vmatpush1.msra.mxu0 %v824
        %2210 = vmatprep.subr.mxu0 %v821
        %2211 = vmatpush1.msra.mxu0 %v820
        %2212 = vmatprep.subr.mxu0 %v817
        %2213 = vmatpush1.msra.mxu0 %v816
        %2214 = vmatprep.subr.mxu0 %v813
        %2215 = vmatpush1.msra.mxu0 %v812
        %2216 = vmatprep.subr.mxu0 %v809
        %2217 = vmatpush1.msra.mxu0 %v808
        %2218 = vmatprep.subr.mxu0 %v805
        %2219 = vmatpush1.msra.mxu0 %v804
        %2220 = vmatprep.subr.mxu0 %v929
        %2221 = vmatpush2.msra.mxu0 %v928
        %2222 = vmatprep.subr.mxu0 %v925
        %2223 = vmatpush2.msra.mxu0 %v924
        %2224 = vmatprep.subr.mxu0 %v921
        %2225 = vmatpush2.msra.mxu0 %v920
        %2226 = vmatprep.subr.mxu0 %v917
        %2227 = vmatpush2.msra.mxu0 %v916
        %2228 = vmatprep.subr.mxu0 %v913
        %2229 = vmatpush2.msra.mxu0 %v912
        %2230 = vmatprep.subr.mxu0 %v909
        %2231 = vmatpush2.msra.mxu0 %v908
        %2232 = vmatprep.subr.mxu0 %v905
        %2233 = vmatpush2.msra.mxu0 %v904
        %2234 = vmatprep.subr.mxu0 %v901
        %2235 = vmatpush2.msra.mxu0 %v900
        %2236 = vmatprep.subr.mxu0 %v897
        %2237 = vmatpush2.msra.mxu0 %v896
        %2238 = vmatprep.subr.mxu0 %v893
        %2239 = vmatpush2.msra.mxu0 %v892
        %2240 = vmatprep.subr.mxu0 %v889
        %2241 = vmatpush2.msra.mxu0 %v888
        %2242 = vmatprep.subr.mxu0 %v885
        %2243 = vmatpush2.msra.mxu0 %v884
        %2244 = vmatprep.subr.mxu0 %v881
        %2245 = vmatpush2.msra.mxu0 %v880
        %2246 = vmatprep.subr.mxu0 %v877
        %2247 = vmatpush2.msra.mxu0 %v876
        %2248 = vmatprep.subr.mxu0 %v873
        %2249 = vmatpush2.msra.mxu0 %v872
        %2250 = vmatprep.subr.mxu0 %v869
        %2251 = vmatpush2.msra.mxu0 %v868
        %2252 = vmatprep.mubr.f32.mxu0 %v283
        %2253 = vmatmul.mubr.f32.gmra.mxu0 %v282
        %v2254 = vpop.f32.mrf.mxu0
        %v2255 = vadd.f32 %v2184, %v2254
        %v2256 = vpop.f32.mrf.mxu0
        %v2257 = vadd.f32 %v2186, %v2256
        %2258 = vdwg.mxu0
        %2259 = vmatprep.subr.mxu0 %v993
        %2260 = vmatpush1.msra.mxu0 %v992
        %2261 = vmatprep.subr.mxu0 %v989
        %2262 = vmatpush1.msra.mxu0 %v988
        %2263 = vmatprep.subr.mxu0 %v985
        %2264 = vmatpush1.msra.mxu0 %v984
        %2265 = vmatprep.subr.mxu0 %v981
        %2266 = vmatpush1.msra.mxu0 %v980
        %2267 = vmatprep.subr.mxu0 %v977
        %2268 = vmatpush1.msra.mxu0 %v976
        %2269 = vmatprep.subr.mxu0 %v973
        %2270 = vmatpush1.msra.mxu0 %v972
        %2271 = vmatprep.subr.mxu0 %v969
        %2272 = vmatpush1.msra.mxu0 %v968
        %2273 = vmatprep.subr.mxu0 %v965
        %2274 = vmatpush1.msra.mxu0 %v964
        %2275 = vmatprep.subr.mxu0 %v961
        %2276 = vmatpush1.msra.mxu0 %v960
        %2277 = vmatprep.subr.mxu0 %v957
        %2278 = vmatpush1.msra.mxu0 %v956
        %2279 = vmatprep.subr.mxu0 %v953
        %2280 = vmatpush1.msra.mxu0 %v952
        %2281 = vmatprep.subr.mxu0 %v949
        %2282 = vmatpush1.msra.mxu0 %v948
        %2283 = vmatprep.subr.mxu0 %v945
        %2284 = vmatpush1.msra.mxu0 %v944
        %2285 = vmatprep.subr.mxu0 %v941
        %2286 = vmatpush1.msra.mxu0 %v940
        %2287 = vmatprep.subr.mxu0 %v937
        %2288 = vmatpush1.msra.mxu0 %v936
        %2289 = vmatprep.subr.mxu0 %v933
        %2290 = vmatpush1.msra.mxu0 %v932
        %2291 = vmatprep.subr.mxu0 %v1057
        %2292 = vmatpush2.msra.mxu0 %v1056
        %2293 = vmatprep.subr.mxu0 %v1053
        %2294 = vmatpush2.msra.mxu0 %v1052
        %2295 = vmatprep.subr.mxu0 %v1049
        %2296 = vmatpush2.msra.mxu0 %v1048
        %2297 = vmatprep.subr.mxu0 %v1045
        %2298 = vmatpush2.msra.mxu0 %v1044
        %2299 = vmatprep.subr.mxu0 %v1041
        %2300 = vmatpush2.msra.mxu0 %v1040
        %2301 = vmatprep.subr.mxu0 %v1037
        %2302 = vmatpush2.msra.mxu0 %v1036
        %2303 = vmatprep.subr.mxu0 %v1033
        %2304 = vmatpush2.msra.mxu0 %v1032
        %2305 = vmatprep.subr.mxu0 %v1029
        %2306 = vmatpush2.msra.mxu0 %v1028
        %2307 = vmatprep.subr.mxu0 %v1025
        %2308 = vmatpush2.msra.mxu0 %v1024
        %2309 = vmatprep.subr.mxu0 %v1021
        %2310 = vmatpush2.msra.mxu0 %v1020
        %2311 = vmatprep.subr.mxu0 %v1017
        %2312 = vmatpush2.msra.mxu0 %v1016
        %2313 = vmatprep.subr.mxu0 %v1013
        %2314 = vmatpush2.msra.mxu0 %v1012
        %2315 = vmatprep.subr.mxu0 %v1009
        %2316 = vmatpush2.msra.mxu0 %v1008
        %2317 = vmatprep.subr.mxu0 %v1005
        %2318 = vmatpush2.msra.mxu0 %v1004
        %2319 = vmatprep.subr.mxu0 %v1001
        %2320 = vmatpush2.msra.mxu0 %v1000
        %2321 = vmatprep.subr.mxu0 %v997
        %2322 = vmatpush2.msra.mxu0 %v996
        %2323 = vmatprep.mubr.f32.mxu0 %v285
        %2324 = vmatmul.mubr.f32.gmra.mxu0 %v284
        %v2325 = vpop.f32.mrf.mxu0
        %v2326 = vadd.f32 %v2255, %v2325
        %v2327 = vpop.f32.mrf.mxu0
        %v2328 = vadd.f32 %v2257, %v2327
        %2329 = vdwg.mxu0
        %2330 = vmatprep.subr.mxu0 %v1121
        %2331 = vmatpush1.msra.mxu0 %v1120
        %2332 = vmatprep.subr.mxu0 %v1117
        %2333 = vmatpush1.msra.mxu0 %v1116
        %2334 = vmatprep.subr.mxu0 %v1113
        %2335 = vmatpush1.msra.mxu0 %v1112
        %2336 = vmatprep.subr.mxu0 %v1109
        %2337 = vmatpush1.msra.mxu0 %v1108
        %2338 = vmatprep.subr.mxu0 %v1105
        %2339 = vmatpush1.msra.mxu0 %v1104
        %2340 = vmatprep.subr.mxu0 %v1101
        %2341 = vmatpush1.msra.mxu0 %v1100
        %2342 = vmatprep.subr.mxu0 %v1097
        %2343 = vmatpush1.msra.mxu0 %v1096
        %2344 = vmatprep.subr.mxu0 %v1093
        %2345 = vmatpush1.msra.mxu0 %v1092
        %2346 = vmatprep.subr.mxu0 %v1089
        %2347 = vmatpush1.msra.mxu0 %v1088
        %2348 = vmatprep.subr.mxu0 %v1085
        %2349 = vmatpush1.msra.mxu0 %v1084
        %2350 = vmatprep.subr.mxu0 %v1081
        %2351 = vmatpush1.msra.mxu0 %v1080
        %2352 = vmatprep.subr.mxu0 %v1077
        %2353 = vmatpush1.msra.mxu0 %v1076
        %2354 = vmatprep.subr.mxu0 %v1073
        %2355 = vmatpush1.msra.mxu0 %v1072
        %2356 = vmatprep.subr.mxu0 %v1069
        %2357 = vmatpush1.msra.mxu0 %v1068
        %2358 = vmatprep.subr.mxu0 %v1065
        %2359 = vmatpush1.msra.mxu0 %v1064
        %2360 = vmatprep.subr.mxu0 %v1061
        %2361 = vmatpush1.msra.mxu0 %v1060
        %2362 = vmatprep.subr.mxu0 %v1185
        %2363 = vmatpush2.msra.mxu0 %v1184
        %2364 = vmatprep.subr.mxu0 %v1181
        %2365 = vmatpush2.msra.mxu0 %v1180
        %2366 = vmatprep.subr.mxu0 %v1177
        %2367 = vmatpush2.msra.mxu0 %v1176
        %2368 = vmatprep.subr.mxu0 %v1173
        %2369 = vmatpush2.msra.mxu0 %v1172
        %2370 = vmatprep.subr.mxu0 %v1169
        %2371 = vmatpush2.msra.mxu0 %v1168
        %2372 = vmatprep.subr.mxu0 %v1165
        %2373 = vmatpush2.msra.mxu0 %v1164
        %2374 = vmatprep.subr.mxu0 %v1161
        %2375 = vmatpush2.msra.mxu0 %v1160
        %2376 = vmatprep.subr.mxu0 %v1157
        %2377 = vmatpush2.msra.mxu0 %v1156
        %2378 = vmatprep.subr.mxu0 %v1153
        %2379 = vmatpush2.msra.mxu0 %v1152
        %2380 = vmatprep.subr.mxu0 %v1149
        %2381 = vmatpush2.msra.mxu0 %v1148
        %2382 = vmatprep.subr.mxu0 %v1145
        %2383 = vmatpush2.msra.mxu0 %v1144
        %2384 = vmatprep.subr.mxu0 %v1141
        %2385 = vmatpush2.msra.mxu0 %v1140
        %2386 = vmatprep.subr.mxu0 %v1137
        %2387 = vmatpush2.msra.mxu0 %v1136
        %2388 = vmatprep.subr.mxu0 %v1133
        %2389 = vmatpush2.msra.mxu0 %v1132
        %2390 = vmatprep.subr.mxu0 %v1129
        %2391 = vmatpush2.msra.mxu0 %v1128
        %2392 = vmatprep.subr.mxu0 %v1125
        %2393 = vmatpush2.msra.mxu0 %v1124
        %2394 = vmatprep.mubr.f32.mxu0 %v287
        %2395 = vmatmul.mubr.f32.gmra.mxu0 %v286
        %v2396 = vpop.f32.mrf.mxu0
        %v2397 = vadd.f32 %v2326, %v2396
        %v2398 = vpop.f32.mrf.mxu0
        %v2399 = vadd.f32 %v2328, %v2398
        %2400 = vdwg.mxu0
        %2401 = vmatprep.subr.mxu0 %v1249
        %2402 = vmatpush1.msra.mxu0 %v1248
        %2403 = vmatprep.subr.mxu0 %v1245
        %2404 = vmatpush1.msra.mxu0 %v1244
        %2405 = vmatprep.subr.mxu0 %v1241
        %2406 = vmatpush1.msra.mxu0 %v1240
        %2407 = vmatprep.subr.mxu0 %v1237
        %2408 = vmatpush1.msra.mxu0 %v1236
        %2409 = vmatprep.subr.mxu0 %v1233
        %2410 = vmatpush1.msra.mxu0 %v1232
        %2411 = vmatprep.subr.mxu0 %v1229
        %2412 = vmatpush1.msra.mxu0 %v1228
        %2413 = vmatprep.subr.mxu0 %v1225
        %2414 = vmatpush1.msra.mxu0 %v1224
        %2415 = vmatprep.subr.mxu0 %v1221
        %2416 = vmatpush1.msra.mxu0 %v1220
        %2417 = vmatprep.subr.mxu0 %v1217
        %2418 = vmatpush1.msra.mxu0 %v1216
        %2419 = vmatprep.subr.mxu0 %v1213
        %2420 = vmatpush1.msra.mxu0 %v1212
        %2421 = vmatprep.subr.mxu0 %v1209
        %2422 = vmatpush1.msra.mxu0 %v1208
        %2423 = vmatprep.subr.mxu0 %v1205
        %2424 = vmatpush1.msra.mxu0 %v1204
        %2425 = vmatprep.subr.mxu0 %v1201
        %2426 = vmatpush1.msra.mxu0 %v1200
        %2427 = vmatprep.subr.mxu0 %v1197
        %2428 = vmatpush1.msra.mxu0 %v1196
        %2429 = vmatprep.subr.mxu0 %v1193
        %2430 = vmatpush1.msra.mxu0 %v1192
        %2431 = vmatprep.subr.mxu0 %v1189
        %2432 = vmatpush1.msra.mxu0 %v1188
        %2433 = vmatprep.subr.mxu0 %v1313
        %2434 = vmatpush2.msra.mxu0 %v1312
        %2435 = vmatprep.subr.mxu0 %v1309
        %2436 = vmatpush2.msra.mxu0 %v1308
        %2437 = vmatprep.subr.mxu0 %v1305
        %2438 = vmatpush2.msra.mxu0 %v1304
        %2439 = vmatprep.subr.mxu0 %v1301
        %2440 = vmatpush2.msra.mxu0 %v1300
        %2441 = vmatprep.subr.mxu0 %v1297
        %2442 = vmatpush2.msra.mxu0 %v1296
        %2443 = vmatprep.subr.mxu0 %v1293
        %2444 = vmatpush2.msra.mxu0 %v1292
        %2445 = vmatprep.subr.mxu0 %v1289
        %2446 = vmatpush2.msra.mxu0 %v1288
        %2447 = vmatprep.subr.mxu0 %v1285
        %2448 = vmatpush2.msra.mxu0 %v1284
        %2449 = vmatprep.subr.mxu0 %v1281
        %2450 = vmatpush2.msra.mxu0 %v1280
        %2451 = vmatprep.subr.mxu0 %v1277
        %2452 = vmatpush2.msra.mxu0 %v1276
        %2453 = vmatprep.subr.mxu0 %v1273
        %2454 = vmatpush2.msra.mxu0 %v1272
        %2455 = vmatprep.subr.mxu0 %v1269
        %2456 = vmatpush2.msra.mxu0 %v1268
        %2457 = vmatprep.subr.mxu0 %v1265
        %2458 = vmatpush2.msra.mxu0 %v1264
        %2459 = vmatprep.subr.mxu0 %v1261
        %2460 = vmatpush2.msra.mxu0 %v1260
        %2461 = vmatprep.subr.mxu0 %v1257
        %2462 = vmatpush2.msra.mxu0 %v1256
        %2463 = vmatprep.subr.mxu0 %v1253
        %2464 = vmatpush2.msra.mxu0 %v1252
        %2465 = vmatprep.mubr.f32.mxu0 %v289
        %2466 = vmatmul.mubr.f32.gmra.mxu0 %v288
        %v2467 = vpop.f32.mrf.mxu0
        %v2468 = vadd.f32 %v2397, %v2467
        %v2469 = vpop.f32.mrf.mxu0
        %v2470 = vadd.f32 %v2399, %v2469
        %2471 = vdwg.mxu0
        %2472 = vst [vmem:[%s272] sm:$0xff] %v1900
        %2473 = vst [vmem:[%s272 + $0x8] sm:$0xff] %v1902
        %2474 = vst [vmem:[%s272 + $0x10] sm:$0xff] %v2468
        %2475 = vst [vmem:[%s272 + $0x18] sm:$0xff] %v2470
        %s2476 = smul.u32 4, %s25
        %p2477 = scmp.lt.s32.totalorder %s24, 0
        %s2478 = scalar_select %p2477, %s24, 0
        %p2479 = scmp.lt.s32.totalorder %s2476, 7
        %s2480 = scalar_select %p2479, %s2476, 7
        %s2481 = smul.addr %s2478, 8
        %s2482 = sadd.s32 %s2480, %s2481
        %s2483 = smul.addr %s2482, 8
        %s2484 = scalar_lea.vmem %s3, %s2483
        // Predicated region
        $region41: #{_pallas_linear_padded.1} parent=31 // pred_check
          %p2485 = pneg %p130
        $region42: #{_pallas_linear_padded.1} parent=31 // pred_check_branch
          %2487 = sbr.rel (%p2485) target = $region44
        $region43: #{_pallas_linear_padded.1} parent=31 // pred_region
          %s2488 = smul.u32 4, %s25
        $region44: #{_pallas_linear_padded.1} parent=31 // pred_fallthru
          _
      $region32: #{_pallas_linear_padded.1} parent=5 // pred_fallthru
        _
      %p2489 = scmp.le.s32.totalorder 2, %s15
      // Predicated region
      $region45: #{_pallas_linear_padded.1} parent=5 // pred_check
        %p2490 = pneg %p2489
      $region46: #{_pallas_linear_padded.1} parent=5 // pred_check_branch
        %2492 = sbr.rel (%p2490) target = $region48
      $region47: #{_pallas_linear_padded.1} parent=5 // pred_region
        %s2493 = ssub.s32 %s15, 2
        // Predicated region
        $region49: #{_pallas_linear_padded.1} parent=47 // pred_check
          %p2494 = pneg %p136
        $region50: #{_pallas_linear_padded.1} parent=47 // pred_check_branch
          %2496 = sbr.rel (%p2494) target = $region52
        $region51: #{_pallas_linear_padded.1} parent=47 // pred_region
          %s2497 = smul.u32 4, %s27
          %p2498 = scmp.lt.s32.totalorder %s26, 0
          %s2499 = scalar_select %p2498, %s26, 0
          %p2500 = scmp.lt.s32.totalorder %s2497, 7
          %s2501 = scalar_select %p2500, %s2497, 7
          %s2502 = smul.addr %s2499, 8
          %s2503 = sadd.s32 %s2501, %s2502
          %s2504 = smul.addr %s2503, 8
          %s2505 = scalar_lea.vmem %s3, %s2504
        $region52: #{_pallas_linear_padded.1} parent=47 // pred_fallthru
          _
      $region48: #{_pallas_linear_padded.1} parent=5 // pred_fallthru
        _
    $region6: #{_pallas_linear_padded.1} parent=1 // loop_footer
      %s19 = sadd.s32 1, %s15
    $region7: #{_pallas_linear_padded.1} parent=1 // loop_footer_branch
      %14 = sbr.rel target = $region3
    $region8: #{_pallas_linear_padded.1} parent=1 // loop_exit
      _
    %2506 = vsyncpa [#allocation3], 1
    %s2507 = scalar_lea.sflag [#allocation3], 1
    %2508 = vsyncpa %s2507, 1
    %2509 = vsyncpa [#allocation5], 1
    %s2510 = scalar_lea.sflag [#allocation5], 1
    %2511 = vsyncpa %s2510, 1

</llo_original>
